<compile_context>
chip_gen: v6e
topology: v6e:2x2x1
jax: 0.10.0
libtpu: 0.0.40
codegen_flags: <defaults>
</compile_context>

<pallas_src>
import functools

import jax
import jax.numpy as jnp
from jax.experimental import pallas as pl
from jax.experimental.pallas import tpu as pltpu


# ----------------------------- in-kernel helpers -----------------------------

def _layernorm(x, w, b, eps=1e-5):
    # PyTorch nn.LayerNorm: biased variance over last dim, eps inside the sqrt.
    mu = jnp.mean(x, axis=-1, keepdims=True)
    var = jnp.mean((x - mu) ** 2, axis=-1, keepdims=True)
    return (x - mu) * jax.lax.rsqrt(var + eps) * w + b


def _attention(qkv, n_head, q_tile):
    """Causal multi-head attention on one batch row.

    qkv: (T, 3C) f32, fused q|k|v projections (q already pre-scaled by 1/sqrt(dh)).
    Flash-style statically-unrolled tiling over query / KV tiles with online
    softmax; KV tiles strictly above the causal diagonal are skipped, so only an
    (H, TQ, TKV) score tile is live at any time (never the full (H, T, T)).
    Returns (T, C) f32.
    """
    T, C3 = qkv.shape
    C = C3 // 3
    dh = C // n_head

    def heads(base):
        # (T, C) slab of the fused qkv -> (H, T, dh) bf16 via static slices.
        # TODO(synk): replace the static slice+concat head split/merge with
        # pltpu.einshape('t(hd)->htd') once grouped-dim equations are confirmed
        # to lower on all targets.
        parts = [qkv[:, base + h * dh: base + (h + 1) * dh][None]
                 for h in range(n_head)]
        return jnp.concatenate(parts, axis=0).astype(jnp.bfloat16)

    qh, kh, vh = heads(0), heads(C), heads(2 * C)

    n_tiles = T // q_tile
    out_tiles = []
    for i in range(n_tiles):                         # query tiles (static unroll)
        q_t = qh[:, i * q_tile:(i + 1) * q_tile, :]
        m = jnp.full((n_head, q_tile, 1), -1e30, jnp.float32)
        l = jnp.zeros((n_head, q_tile, 1), jnp.float32)
        acc = jnp.zeros((n_head, q_tile, dh), jnp.float32)
        for j in range(i + 1):                       # causal skip: only j <= i
            k_t = kh[:, j * q_tile:(j + 1) * q_tile, :]
            v_t = vh[:, j * q_tile:(j + 1) * q_tile, :]
            s = jnp.einsum('htd,hsd->hts', q_t, k_t,
                           preferred_element_type=jnp.float32)      # (H,TQ,TKV)
            if j == i:                               # diagonal tile: intra-tile mask
                row = jax.lax.broadcasted_iota(jnp.int32, (q_tile, q_tile), 0)
                col = jax.lax.broadcasted_iota(jnp.int32, (q_tile, q_tile), 1)
                s = jnp.where((row >= col)[None, :, :], s, -1e30)
            m_new = jnp.maximum(m, jnp.max(s, axis=-1, keepdims=True))
            alpha = jnp.exp(m - m_new)
            p = jnp.exp(s - m_new)
            l = alpha * l + jnp.sum(p, axis=-1, keepdims=True)
            acc = alpha * acc + jnp.einsum('hts,hsd->htd', p.astype(jnp.bfloat16),
                                           v_t, preferred_element_type=jnp.float32)
            m = m_new
        y_t = acc * pl.reciprocal(l, approx=True)                   # (H, TQ, dh)
        # merge heads back to (TQ, C)
        out_tiles.append(jnp.concatenate([y_t[h] for h in range(n_head)], axis=-1))
    return jnp.concatenate(out_tiles, axis=0) if n_tiles > 1 else out_tiles[0]


# ------------------------------- block kernel --------------------------------
# One transformer Block for one batch element:
#   x = x + attn(ln1(x)); x = x + mlp(ln2(x))
# Weights arrive pre-transposed to (in, out) and pre-cast to bf16; biases and
# LayerNorm params stay f32. The residual stream is kept in f32.
# The LAST block additionally applies ln_f and emits bf16 (fused epilogue), so
# the vocab-tiled logits kernel never recomputes LayerNorm per vocab tile.

def _block_kernel(n_head, q_tile, apply_final_ln,
                  x_ref,
                  ln1w, ln1b, wqkv, bqkv, wo, bo,
                  ln2w, ln2b, w1, b1, w2, b2,
                  lnfw, lnfb,
                  o_ref):
    x = x_ref[0]                                     # (T, C) f32 residual stream

    # ---- causal self attention ----
    h = _layernorm(x, ln1w[...], ln1b[...]).astype(jnp.bfloat16)
    qkv = jnp.dot(h, wqkv[...], preferred_element_type=jnp.float32) + bqkv[...]
    y = _attention(qkv, n_head, q_tile)
    y = jnp.dot(y.astype(jnp.bfloat16), wo[...],
                preferred_element_type=jnp.float32) + bo[...]
    x = x + y                                        # residual (attn dropout = identity)

    # ---- MLP ----
    h2 = _layernorm(x, ln2w[...], ln2b[...]).astype(jnp.bfloat16)
    m = jnp.dot(h2, w1[...], preferred_element_type=jnp.float32) + b1[...]
    # TODO(synk): PyTorch nn.GELU() is the exact erf-GELU; erf has no guaranteed
    # Mosaic lowering, so the tanh approximation is used (negligible diff here).
    m = jax.nn.gelu(m, approximate=True)
    m = jnp.dot(m.astype(jnp.bfloat16), w2[...],
                preferred_element_type=jnp.float32) + b2[...]
    x = x + m                                        # residual (mlp dropout = identity)

    if apply_final_ln:
        o_ref[0] = _layernorm(x, lnfw[...], lnfb[...]).astype(jnp.bfloat16)
    else:
        o_ref[0] = x


# ------------------------------- final kernel --------------------------------
# Vocab-tiled logits matmul: logits[:, v_tile] = x_lnf @ emb_t[:, v_tile].
# ln_f was already applied (and bf16-cast) in the last block's epilogue.

def _final_kernel(x_ref, embt_ref, o_ref):
    o_ref[0] = jnp.dot(x_ref[0], embt_ref[...],
                       preferred_element_type=jnp.float32).astype(o_ref.dtype)


# --------------------------------- helpers ------------------------------------

def _const_weight_specs(weights, index_map):
    """Constant-index weight specs: single-buffered (no double-buffer VMEM waste)."""
    try:
        return [pl.BlockSpec(w.shape, index_map, pipeline_mode=pl.Buffered(1))
                for w in weights]
    except (AttributeError, TypeError):
        return [pl.BlockSpec(w.shape, index_map) for w in weights]


def _pick_attn_tile(T):
    if T <= 256:
        return T
    for t in (256, 128):                 # 256-aligned preferred (v6e/v7x MXU fill)
        if T % t == 0:
            return t
    return T


def _pick_tile_v(Vp):
    for tv in (2048, 1024, 512, 256, 128):
        if Vp % tv == 0:
            return tv
    return Vp


def _vmem_limit(weight_bytes, act_bytes):
    # explicit limit: defaults (16/32 MiB) are too small for real-size layers;
    # capped at 64 MiB so it is valid on v7x as well.
    return int(min(64 << 20, max(32 << 20, 2 * (weight_bytes + act_bytes) + (8 << 20))))


# --------------------------------- wrappers -----------------------------------

def block_forward(x, blk, n_head, lnf_w, lnf_b, apply_final_ln):
    B, T, C = x.shape
    H, dh = n_head, C // n_head
    qt = _pick_attn_tile(T)

    weights = [blk['ln1_w'], blk['ln1_b'],
               blk['wqkv_t'], blk['bqkv'],
               blk['wo_t'], blk['bo'],
               blk['ln2_w'], blk['ln2_b'],
               blk['w1_t'], blk['b1'], blk['w2_t'], blk['b2'],
               lnf_w, lnf_b]

    weight_bytes = sum(int(w.size) * w.dtype.itemsize for w in weights)
    act_bytes = (
        2 * 2 * 4 * T * C              # x in + out blocks (double-buffered) f32
        + 4 * T * 3 * C                # fused qkv f32
        + 2 * 3 * H * T * dh           # bf16 per-head q/k/v
        + 2 * 4 * H * qt * qt          # score + prob tile f32
        + 4 * H * T * dh + 4 * T * C   # attention accumulators + merged y
        + 2 * 4 * T * 4 * C            # MLP hidden (pre/post GELU) f32
    )
    out_dtype = jnp.bfloat16 if apply_final_ln else jnp.float32

    flops = int(2 * B * T * C * 12 * C + 2 * B * T * T * C)   # proj/MLP + causal attn
    transc = int(B * H * T * T // 2 + 4 * B * T * C)
    bytes_accessed = int(weight_bytes + B * T * C * 4
                         + B * T * C * jnp.dtype(out_dtype).itemsize)

    return pl.pallas_call(
        functools.partial(_block_kernel, n_head, qt, apply_final_ln),
        out_shape=jax.ShapeDtypeStruct((B, T, C), out_dtype),
        grid=(B,),
        in_specs=[pl.BlockSpec((1, T, C), lambda b: (b, 0, 0))]
                 + _const_weight_specs(weights, lambda b: (0, 0)),
        out_specs=pl.BlockSpec((1, T, C), lambda b: (b, 0, 0)),
        compiler_params=pltpu.CompilerParams(
            dimension_semantics=("parallel",),
            vmem_limit_bytes=_vmem_limit(weight_bytes, act_bytes)),
        cost_estimate=pl.CostEstimate(flops=flops, transcendentals=transc,
                                      bytes_accessed=bytes_accessed),
    )(x, *weights)


def final_forward(x, emb_t, vocab_size, logits_dtype=jnp.float32):
    # x: (B, T, C) bf16 = ln_f(residual) from the last block's epilogue.
    # emb_t: (C, Vp) bf16, vocab axis zero-padded to a multiple of 128.
    B, T, C = x.shape
    Vp = emb_t.shape[1]
    tv = _pick_tile_v(Vp)

    weight_bytes = 2 * C * tv * emb_t.dtype.itemsize            # double-buffered tile
    act_bytes = (2 * T * C * x.dtype.itemsize
                 + 2 * T * tv * jnp.dtype(logits_dtype).itemsize
                 + 4 * T * tv)
    flops = int(2 * B * T * C * Vp)
    bytes_accessed = int(int(emb_t.size) * emb_t.dtype.itemsize
                         + int(x.size) * x.dtype.itemsize
                         + B * T * Vp * jnp.dtype(logits_dtype).itemsize)

    logits = pl.pallas_call(
        _final_kernel,
        out_shape=jax.ShapeDtypeStruct((B, T, Vp), logits_dtype),
        grid=(B, Vp // tv),
        in_specs=[pl.BlockSpec((1, T, C), lambda b, v: (b, 0, 0)),
                  pl.BlockSpec((C, tv), lambda b, v: (0, v))],
        out_specs=pl.BlockSpec((1, T, tv), lambda b, v: (b, 0, v)),
        compiler_params=pltpu.CompilerParams(
            dimension_semantics=("parallel", "parallel"),
            vmem_limit_bytes=_vmem_limit(weight_bytes, act_bytes)),
        cost_estimate=pl.CostEstimate(flops=flops, transcendentals=0,
                                      bytes_accessed=bytes_accessed),
    )(x, emb_t)
    return logits[:, :, :vocab_size]


def gpt_forward(input_ids, kparams, n_head):
    # token embedding gather (glue, plain JAX)
    x = kparams['tok_emb'][input_ids]                # (B, T, C) f32
    n = len(kparams['blocks'])
    if n == 0:
        # degenerate n_layer==0 config: ln_f in plain JAX glue.
        mu = jnp.mean(x, -1, keepdims=True)
        var = jnp.mean((x - mu) ** 2, -1, keepdims=True)
        x = ((x - mu) * jax.lax.rsqrt(var + 1e-5) * kparams['lnf_w'][0]
             + kparams['lnf_b'][0]).astype(jnp.bfloat16)
    # TODO(synk): cross-pallas_call weight prefetch (P10) to hide per-layer
    # weight DMA at small batch is not implemented here.
    for i, blk in enumerate(kparams['blocks']):
        x = block_forward(x, blk, n_head, kparams['lnf_w'], kparams['lnf_b'],
                          apply_final_ln=(i == n - 1))
    # x is now bf16 ln_f(residual); stream vocab tiles of the tied embedding.
    return final_forward(x, kparams['emb_t'], kparams['vocab_size'])


# ------------------------------ parameters -------------------------------------

def init_params(key, vocab_size, n_layer, n_embd):
    """f32 master parameters in the PyTorch layout (Linear weight = (out, in))."""
    def nrm(k, shape):
        return 0.02 * jax.random.normal(k, shape, jnp.float32)

    keys = jax.random.split(key, 1 + 6 * n_layer)
    C = n_embd
    params = {
        'tok_emb': nrm(keys[0], (vocab_size, C)),
        'lnf_w': jnp.ones((C,), jnp.float32),
        'lnf_b': jnp.zeros((C,), jnp.float32),
        'blocks': [],
    }
    for l in range(n_layer):
        kq, kk, kv, ko, k1, k2 = keys[1 + 6 * l: 1 + 6 * (l + 1)]
        params['blocks'].append({
            'ln1_w': jnp.ones((C,), jnp.float32), 'ln1_b': jnp.zeros((C,), jnp.float32),
            'wq': nrm(kq, (C, C)), 'bq': jnp.zeros((C,), jnp.float32),
            'wk': nrm(kk, (C, C)), 'bk': jnp.zeros((C,), jnp.float32),
            'wv': nrm(kv, (C, C)), 'bv': jnp.zeros((C,), jnp.float32),
            'wo': nrm(ko, (C, C)), 'bo': jnp.zeros((C,), jnp.float32),
            'ln2_w': jnp.ones((C,), jnp.float32), 'ln2_b': jnp.zeros((C,), jnp.float32),
            'w1': nrm(k1, (4 * C, C)), 'b1': jnp.zeros((4 * C,), jnp.float32),
            'w2': nrm(k2, (C, 4 * C)), 'b2': jnp.zeros((C,), jnp.float32),
        })
    return params


def prepare_kernel_params(params, n_head):
    """One-time layout/dtype prep:
      * Linear weights transposed to (in, out) and cast bf16,
      * q/k/v fused into one (C, 3C) weight / (1, 3C) bias with the 1/sqrt(dh)
        scale folded into the q columns,
      * embedding transposed to (C, V) bf16 and vocab-padded to a multiple of 128,
      * biases / LayerNorm params stay f32 as (1, n) rows.
    """
    C = params['tok_emb'].shape[1]
    V = params['tok_emb'].shape[0]
    dh = C // n_head
    scale = 1.0 / (dh ** 0.5)
    r = lambda v: v.reshape(1, -1)
    t = lambda w: jnp.asarray(w.T, dtype=jnp.bfloat16)

    Vp = ((V + 127) // 128) * 128
    emb_t = params['tok_emb'].T                      # (C, V) f32
    if Vp != V:
        emb_t = jnp.pad(emb_t, ((0, 0), (0, Vp - V)))

    kp = {
        'tok_emb': params['tok_emb'],                # f32 for the gather
        'emb_t': emb_t.astype(jnp.bfloat16),         # (C, Vp) bf16 for logits
        'vocab_size': V,
        'lnf_w': r(params['lnf_w']), 'lnf_b': r(params['lnf_b']),
        'blocks': [],
    }
    for blk in params['blocks']:
        wqkv_t = jnp.concatenate([blk['wq'].T * scale, blk['wk'].T, blk['wv'].T],
                                 axis=1).astype(jnp.bfloat16)        # (C, 3C)
        bqkv = jnp.concatenate([blk['bq'] * scale, blk['bk'], blk['bv']]).reshape(1, -1)
        kp['blocks'].append({
            'ln1_w': r(blk['ln1_w']), 'ln1_b': r(blk['ln1_b']),
            'wqkv_t': wqkv_t, 'bqkv': bqkv,
            'wo_t': t(blk['wo']), 'bo': r(blk['bo']),
            'ln2_w': r(blk['ln2_w']), 'ln2_b': r(blk['ln2_b']),
            'w1_t': t(blk['w1']), 'b1': r(blk['b1']),
            'w2_t': t(blk['w2']), 'b2': r(blk['b2']),
        })
    return kp


# ------------------------------ pure-JAX reference -----------------------------

def reference_forward(input_ids, params, n_head):
    """f32 reference matching the PyTorch module (exact erf-GELU)."""
    def ln(x, w, b, eps=1e-5):
        mu = jnp.mean(x, -1, keepdims=True)
        var = jnp.mean((x - mu) ** 2, -1, keepdims=True)
        return (x - mu) / jnp.sqrt(var + eps) * w + b

    x = params['tok_emb'][input_ids]
    B, T, C = x.shape
    dh = C // n_head
    causal = jnp.tril(jnp.ones((T, T), bool))
    for blk in params['blocks']:
        h = ln(x, blk['ln1_w'], blk['ln1_b'])
        q = h @ blk['wq'].T + blk['bq']
        k = h @ blk['wk'].T + blk['bk']
        v = h @ blk['wv'].T + blk['bv']
        q = q.reshape(B, T, n_head, dh).transpose(0, 2, 1, 3)
        k = k.reshape(B, T, n_head, dh).transpose(0, 2, 1, 3)
        v = v.reshape(B, T, n_head, dh).transpose(0, 2, 1, 3)
        att = (q @ jnp.swapaxes(k, -1, -2)) / jnp.sqrt(jnp.float32(dh))
        att = jnp.where(causal, att, -jnp.inf)
        p = jax.nn.softmax(att, axis=-1)
        y = (p @ v).transpose(0, 2, 1, 3).reshape(B, T, C)
        x = x + y @ blk['wo'].T + blk['bo']
        h2 = ln(x, blk['ln2_w'], blk['ln2_b'])
        m = jax.nn.gelu(h2 @ blk['w1'].T + blk['b1'], approximate=False)
        x = x + m @ blk['w2'].T + blk['b2']
    x = ln(x, params['lnf_w'], params['lnf_b'])
    return x @ params['tok_emb'].T


# ----------------------------------- main --------------------------------------

if __name__ == "__main__":
    vocab_size = 100   # deliberately NOT a multiple of 128: exercises vocab padding
    block_size = 8     # max sequence length
    n_layer = 2
    n_embd = 32
    n_head = 4
    batch = 2
    seq = 8            # T <= block_size

    key = jax.random.PRNGKey(0)
    k_param, k_ids = jax.random.split(key)
    params = init_params(k_param, vocab_size, n_layer, n_embd)
    kparams = prepare_kernel_params(params, n_head)
    input_ids = jax.random.randint(k_ids, (batch, seq), 0, vocab_size, dtype=jnp.int32)

    logits = gpt_forward(input_ids, kparams, n_head)
    logits = jax.block_until_ready(logits)

    assert logits.shape == (batch, seq, vocab_size), logits.shape
    assert bool(jnp.all(jnp.isfinite(logits)))

    ref = reference_forward(input_ids, params, n_head)
    max_err = float(jnp.max(jnp.abs(logits - ref)))
    assert max_err < 3e-2, f"max abs error vs f32 reference: {max_err}"
    print("KERNEL_OK")
</pallas_src>

<mosaic_0001>
module attributes {stable_mosaic.version = 11 : i64} {
  func.func @_block_kernel(%arg0: i32, %arg1: memref<1x8x32xf32, #tpu.memory_space<vmem>>, %arg2: memref<1x32xf32, #tpu.memory_space<vmem>>, %arg3: memref<1x32xf32, #tpu.memory_space<vmem>>, %arg4: memref<32x96xbf16, #tpu.memory_space<vmem>>, %arg5: memref<1x96xf32, #tpu.memory_space<vmem>>, %arg6: memref<32x32xbf16, #tpu.memory_space<vmem>>, %arg7: memref<1x32xf32, #tpu.memory_space<vmem>>, %arg8: memref<1x32xf32, #tpu.memory_space<vmem>>, %arg9: memref<1x32xf32, #tpu.memory_space<vmem>>, %arg10: memref<32x128xbf16, #tpu.memory_space<vmem>>, %arg11: memref<1x128xf32, #tpu.memory_space<vmem>>, %arg12: memref<128x32xbf16, #tpu.memory_space<vmem>>, %arg13: memref<1x32xf32, #tpu.memory_space<vmem>>, %arg14: memref<1x32xf32, #tpu.memory_space<vmem>>, %arg15: memref<1x32xf32, #tpu.memory_space<vmem>>, %arg16: memref<1x8x32xf32, #tpu.memory_space<vmem>>) attributes {dimension_semantics = [#tpu.dimension_semantics<parallel>], iteration_bounds = array<i64: 2>, scalar_prefetch = 0 : i64, scratch_operands = 0 : i64, tpu.core_type = #tpu.core_type<tc>, window_params = [{transform_indices = @transform_0, window_bounds = array<i64: 1, 8, 32>}, {pipeline_mode = #tpu.pipeline_mode<synchronous>, transform_indices = @transform_1, window_bounds = array<i64: 1, 32>}, {pipeline_mode = #tpu.pipeline_mode<synchronous>, transform_indices = @transform_2, window_bounds = array<i64: 1, 32>}, {pipeline_mode = #tpu.pipeline_mode<synchronous>, transform_indices = @transform_3, window_bounds = array<i64: 32, 96>}, {pipeline_mode = #tpu.pipeline_mode<synchronous>, transform_indices = @transform_4, window_bounds = array<i64: 1, 96>}, {pipeline_mode = #tpu.pipeline_mode<synchronous>, transform_indices = @transform_5, window_bounds = array<i64: 32, 32>}, {pipeline_mode = #tpu.pipeline_mode<synchronous>, transform_indices = @transform_6, window_bounds = array<i64: 1, 32>}, {pipeline_mode = #tpu.pipeline_mode<synchronous>, transform_indices = @transform_7, window_bounds = array<i64: 1, 32>}, {pipeline_mode = #tpu.pipeline_mode<synchronous>, transform_indices = @transform_8, window_bounds = array<i64: 1, 32>}, {pipeline_mode = #tpu.pipeline_mode<synchronous>, transform_indices = @transform_9, window_bounds = array<i64: 32, 128>}, {pipeline_mode = #tpu.pipeline_mode<synchronous>, transform_indices = @transform_10, window_bounds = array<i64: 1, 128>}, {pipeline_mode = #tpu.pipeline_mode<synchronous>, transform_indices = @transform_11, window_bounds = array<i64: 128, 32>}, {pipeline_mode = #tpu.pipeline_mode<synchronous>, transform_indices = @transform_12, window_bounds = array<i64: 1, 32>}, {pipeline_mode = #tpu.pipeline_mode<synchronous>, transform_indices = @transform_13, window_bounds = array<i64: 1, 32>}, {pipeline_mode = #tpu.pipeline_mode<synchronous>, transform_indices = @transform_14, window_bounds = array<i64: 1, 32>}, {transform_indices = @transform_15, window_bounds = array<i64: 1, 8, 32>}]} {
    %c0 = arith.constant 0 : index
    %c0_0 = arith.constant 0 : index
    %c0_1 = arith.constant 0 : index
    %0 = vector.load %arg1[%c0, %c0_0, %c0_1] : memref<1x8x32xf32, #tpu.memory_space<vmem>>, vector<1x8x32xf32>
    %1 = vector.shape_cast %0 : vector<1x8x32xf32> to vector<8x32xf32>
    %c0_2 = arith.constant 0 : index
    %c0_3 = arith.constant 0 : index
    %2 = vector.load %arg2[%c0_2, %c0_3] : memref<1x32xf32, #tpu.memory_space<vmem>>, vector<1x32xf32>
    %c0_4 = arith.constant 0 : index
    %c0_5 = arith.constant 0 : index
    %3 = vector.load %arg3[%c0_4, %c0_5] : memref<1x32xf32, #tpu.memory_space<vmem>>, vector<1x32xf32>
    %cst = arith.constant dense<0.000000e+00> : vector<8xf32>
    %4 = vector.multi_reduction <add>, %1, %cst [1] : vector<8x32xf32> to vector<8xf32>
    %5 = vector.shape_cast %4 : vector<8xf32> to vector<8x1xf32>
    %cst_6 = arith.constant 3.200000e+01 : f32
    %6 = vector.broadcast %cst_6 : f32 to vector<8x1xf32>
    %7 = arith.divf %5, %6 : vector<8x1xf32>
    %8 = vector.broadcast %7 : vector<8x1xf32> to vector<8x32xf32>
    %9 = arith.subf %1, %8 : vector<8x32xf32>
    %10 = arith.mulf %9, %9 : vector<8x32xf32>
    %cst_7 = arith.constant dense<0.000000e+00> : vector<8xf32>
    %11 = vector.multi_reduction <add>, %10, %cst_7 [1] : vector<8x32xf32> to vector<8xf32>
    %12 = vector.shape_cast %11 : vector<8xf32> to vector<8x1xf32>
    %cst_8 = arith.constant 3.200000e+01 : f32
    %13 = vector.broadcast %cst_8 : f32 to vector<8x1xf32>
    %14 = arith.divf %12, %13 : vector<8x1xf32>
    %15 = vector.broadcast %7 : vector<8x1xf32> to vector<8x32xf32>
    %16 = arith.subf %1, %15 : vector<8x32xf32>
    %cst_9 = arith.constant 9.99999974E-6 : f32
    %17 = vector.broadcast %cst_9 : f32 to vector<8x1xf32>
    %18 = arith.addf %14, %17 : vector<8x1xf32>
    %19 = math.rsqrt %18 : vector<8x1xf32>
    %20 = vector.broadcast %19 : vector<8x1xf32> to vector<8x32xf32>
    %21 = arith.mulf %16, %20 : vector<8x32xf32>
    %22 = vector.broadcast %2 : vector<1x32xf32> to vector<8x32xf32>
    %23 = arith.mulf %21, %22 : vector<8x32xf32>
    %24 = vector.broadcast %3 : vector<1x32xf32> to vector<8x32xf32>
    %25 = arith.addf %23, %24 : vector<8x32xf32>
    %26 = arith.truncf %25 : vector<8x32xf32> to vector<8x32xbf16>
    %c0_10 = arith.constant 0 : index
    %c0_11 = arith.constant 0 : index
    %27 = vector.load %arg4[%c0_10, %c0_11] : memref<32x96xbf16, #tpu.memory_space<vmem>>, vector<32x96xbf16>
    %cst_12 = arith.constant dense<0.000000e+00> : vector<8x96xf32>
    %28 = tpu.matmul %26, %27, %cst_12 {dimension_numbers = #tpu.dot_dimension_numbers<[1], [0], [0], [1], [0, 0, 1, 1], [], []>} : vector<8x32xbf16>, vector<32x96xbf16>, vector<8x96xf32> -> vector<8x96xf32>
    %c0_13 = arith.constant 0 : index
    %c0_14 = arith.constant 0 : index
    %29 = vector.load %arg5[%c0_13, %c0_14] : memref<1x96xf32, #tpu.memory_space<vmem>>, vector<1x96xf32>
    %30 = vector.broadcast %29 : vector<1x96xf32> to vector<8x96xf32>
    %31 = arith.addf %28, %30 : vector<8x96xf32>
    %32 = vector.extract_strided_slice %31 {offsets = [0, 0], sizes = [8, 8], strides = [1, 1]} : vector<8x96xf32> to vector<8x8xf32>
    %33 = vector.shape_cast %32 : vector<8x8xf32> to vector<1x8x8xf32>
    %34 = vector.extract_strided_slice %31 {offsets = [0, 8], sizes = [8, 8], strides = [1, 1]} : vector<8x96xf32> to vector<8x8xf32>
    %35 = vector.shape_cast %34 : vector<8x8xf32> to vector<1x8x8xf32>
    %36 = vector.extract_strided_slice %31 {offsets = [0, 16], sizes = [8, 8], strides = [1, 1]} : vector<8x96xf32> to vector<8x8xf32>
    %37 = vector.shape_cast %36 : vector<8x8xf32> to vector<1x8x8xf32>
    %38 = vector.extract_strided_slice %31 {offsets = [0, 24], sizes = [8, 8], strides = [1, 1]} : vector<8x96xf32> to vector<8x8xf32>
    %39 = vector.shape_cast %38 : vector<8x8xf32> to vector<1x8x8xf32>
    %40 = tpu.concatenate %33, %35, %37, %39 in 0 : vector<1x8x8xf32>, vector<1x8x8xf32>, vector<1x8x8xf32>, vector<1x8x8xf32> -> vector<4x8x8xf32>
    %41 = arith.truncf %40 : vector<4x8x8xf32> to vector<4x8x8xbf16>
    %42 = vector.extract_strided_slice %31 {offsets = [0, 32], sizes = [8, 8], strides = [1, 1]} : vector<8x96xf32> to vector<8x8xf32>
    %43 = vector.shape_cast %42 : vector<8x8xf32> to vector<1x8x8xf32>
    %44 = vector.extract_strided_slice %31 {offsets = [0, 40], sizes = [8, 8], strides = [1, 1]} : vector<8x96xf32> to vector<8x8xf32>
    %45 = vector.shape_cast %44 : vector<8x8xf32> to vector<1x8x8xf32>
    %46 = vector.extract_strided_slice %31 {offsets = [0, 48], sizes = [8, 8], strides = [1, 1]} : vector<8x96xf32> to vector<8x8xf32>
    %47 = vector.shape_cast %46 : vector<8x8xf32> to vector<1x8x8xf32>
    %48 = vector.extract_strided_slice %31 {offsets = [0, 56], sizes = [8, 8], strides = [1, 1]} : vector<8x96xf32> to vector<8x8xf32>
    %49 = vector.shape_cast %48 : vector<8x8xf32> to vector<1x8x8xf32>
    %50 = tpu.concatenate %43, %45, %47, %49 in 0 : vector<1x8x8xf32>, vector<1x8x8xf32>, vector<1x8x8xf32>, vector<1x8x8xf32> -> vector<4x8x8xf32>
    %51 = arith.truncf %50 : vector<4x8x8xf32> to vector<4x8x8xbf16>
    %52 = vector.extract_strided_slice %31 {offsets = [0, 64], sizes = [8, 8], strides = [1, 1]} : vector<8x96xf32> to vector<8x8xf32>
    %53 = vector.shape_cast %52 : vector<8x8xf32> to vector<1x8x8xf32>
    %54 = vector.extract_strided_slice %31 {offsets = [0, 72], sizes = [8, 8], strides = [1, 1]} : vector<8x96xf32> to vector<8x8xf32>
    %55 = vector.shape_cast %54 : vector<8x8xf32> to vector<1x8x8xf32>
    %56 = vector.extract_strided_slice %31 {offsets = [0, 80], sizes = [8, 8], strides = [1, 1]} : vector<8x96xf32> to vector<8x8xf32>
    %57 = vector.shape_cast %56 : vector<8x8xf32> to vector<1x8x8xf32>
    %58 = vector.extract_strided_slice %31 {offsets = [0, 88], sizes = [8, 8], strides = [1, 1]} : vector<8x96xf32> to vector<8x8xf32>
    %59 = vector.shape_cast %58 : vector<8x8xf32> to vector<1x8x8xf32>
    %60 = tpu.concatenate %53, %55, %57, %59 in 0 : vector<1x8x8xf32>, vector<1x8x8xf32>, vector<1x8x8xf32>, vector<1x8x8xf32> -> vector<4x8x8xf32>
    %61 = arith.truncf %60 : vector<4x8x8xf32> to vector<4x8x8xbf16>
    %cst_15 = arith.constant -1.000000e+30 : f32
    %62 = vector.broadcast %cst_15 : f32 to vector<4x8x1xf32>
    %cst_16 = arith.constant 0.000000e+00 : f32
    %63 = vector.broadcast %cst_16 : f32 to vector<4x8x1xf32>
    %cst_17 = arith.constant 0.000000e+00 : f32
    %64 = vector.broadcast %cst_17 : f32 to vector<4x8x8xf32>
    "tpu.trace_start"() <{level = 10 : i32, message = "htd,hsd->hts"}> : () -> ()
    %cst_18 = arith.constant dense<0.000000e+00> : vector<4x8x8xf32>
    %65 = tpu.matmul %41, %51, %cst_18 {dimension_numbers = #tpu.dot_dimension_numbers<[2], [2], [1], [1], [0, 0, 0, 1, 1, 1], [0], [0]>} : vector<4x8x8xbf16>, vector<4x8x8xbf16>, vector<4x8x8xf32> -> vector<4x8x8xf32>
    "tpu.trace_stop"() : () -> ()
    %66 = tpu.iota {dimensions = array<i32: 0>} : vector<8x8xi32>
    %67 = tpu.iota {dimensions = array<i32: 1>} : vector<8x8xi32>
    %68 = arith.cmpi sge, %66, %67 : vector<8x8xi32>
    %69 = vector.shape_cast %68 : vector<8x8xi1> to vector<1x8x8xi1>
    %cst_19 = arith.constant -1.000000e+30 : f32
    %70 = vector.shape_cast %69 : vector<1x8x8xi1> to vector<1x8x8xi1>
    %71 = vector.broadcast %70 : vector<1x8x8xi1> to vector<4x8x8xi1>
    %72 = vector.broadcast %cst_19 : f32 to vector<4x8x8xf32>
    %73 = arith.select %71, %65, %72 : vector<4x8x8xi1>, vector<4x8x8xf32>
    %cst_20 = arith.constant dense<0xFF800000> : vector<4x8xf32>
    %74 = vector.multi_reduction <maximumf>, %73, %cst_20 [2] : vector<4x8x8xf32> to vector<4x8xf32>
    %75 = vector.shape_cast %74 : vector<4x8xf32> to vector<4x8x1xf32>
    %76 = arith.maximumf %62, %75 : vector<4x8x1xf32>
    %77 = arith.subf %62, %76 : vector<4x8x1xf32>
    %78 = math.exp %77 : vector<4x8x1xf32>
    %79 = vector.broadcast %76 : vector<4x8x1xf32> to vector<4x8x8xf32>
    %80 = arith.subf %73, %79 : vector<4x8x8xf32>
    %81 = math.exp %80 : vector<4x8x8xf32>
    %82 = arith.mulf %78, %63 : vector<4x8x1xf32>
    %cst_21 = arith.constant dense<0.000000e+00> : vector<4x8xf32>
    %83 = vector.multi_reduction <add>, %81, %cst_21 [2] : vector<4x8x8xf32> to vector<4x8xf32>
    %84 = vector.shape_cast %83 : vector<4x8xf32> to vector<4x8x1xf32>
    %85 = arith.addf %82, %84 : vector<4x8x1xf32>
    %86 = vector.broadcast %78 : vector<4x8x1xf32> to vector<4x8x8xf32>
    %87 = arith.mulf %86, %64 : vector<4x8x8xf32>
    %88 = arith.truncf %81 : vector<4x8x8xf32> to vector<4x8x8xbf16>
    "tpu.trace_start"() <{level = 10 : i32, message = "hts,hsd->htd"}> : () -> ()
    %cst_22 = arith.constant dense<0.000000e+00> : vector<4x8x8xf32>
    %89 = tpu.matmul %88, %61, %cst_22 {dimension_numbers = #tpu.dot_dimension_numbers<[2], [1], [1], [2], [0, 0, 0, 1, 1, 2], [0], [0]>} : vector<4x8x8xbf16>, vector<4x8x8xbf16>, vector<4x8x8xf32> -> vector<4x8x8xf32>
    "tpu.trace_stop"() : () -> ()
    %90 = arith.addf %87, %89 : vector<4x8x8xf32>
    %91 = tpu.reciprocal %85 {approx = true} : vector<4x8x1xf32> -> vector<4x8x1xf32>
    %92 = vector.broadcast %91 : vector<4x8x1xf32> to vector<4x8x8xf32>
    %93 = arith.mulf %90, %92 : vector<4x8x8xf32>
    %94 = vector.extract_strided_slice %93 {offsets = [0, 0, 0], sizes = [1, 8, 8], strides = [1, 1, 1]} : vector<4x8x8xf32> to vector<1x8x8xf32>
    %95 = vector.shape_cast %94 : vector<1x8x8xf32> to vector<8x8xf32>
    %96 = vector.extract_strided_slice %93 {offsets = [1, 0, 0], sizes = [1, 8, 8], strides = [1, 1, 1]} : vector<4x8x8xf32> to vector<1x8x8xf32>
    %97 = vector.shape_cast %96 : vector<1x8x8xf32> to vector<8x8xf32>
    %98 = vector.extract_strided_slice %93 {offsets = [2, 0, 0], sizes = [1, 8, 8], strides = [1, 1, 1]} : vector<4x8x8xf32> to vector<1x8x8xf32>
    %99 = vector.shape_cast %98 : vector<1x8x8xf32> to vector<8x8xf32>
    %100 = vector.extract_strided_slice %93 {offsets = [3, 0, 0], sizes = [1, 8, 8], strides = [1, 1, 1]} : vector<4x8x8xf32> to vector<1x8x8xf32>
    %101 = vector.shape_cast %100 : vector<1x8x8xf32> to vector<8x8xf32>
    %102 = tpu.concatenate %95, %97, %99, %101 in 1 : vector<8x8xf32>, vector<8x8xf32>, vector<8x8xf32>, vector<8x8xf32> -> vector<8x32xf32>
    %103 = arith.truncf %102 : vector<8x32xf32> to vector<8x32xbf16>
    %c0_23 = arith.constant 0 : index
    %c0_24 = arith.constant 0 : index
    %104 = vector.load %arg6[%c0_23, %c0_24] : memref<32x32xbf16, #tpu.memory_space<vmem>>, vector<32x32xbf16>
    %cst_25 = arith.constant dense<0.000000e+00> : vector<8x32xf32>
    %105 = tpu.matmul %103, %104, %cst_25 {dimension_numbers = #tpu.dot_dimension_numbers<[1], [0], [0], [1], [0, 0, 1, 1], [], []>} : vector<8x32xbf16>, vector<32x32xbf16>, vector<8x32xf32> -> vector<8x32xf32>
    %c0_26 = arith.constant 0 : index
    %c0_27 = arith.constant 0 : index
    %106 = vector.load %arg7[%c0_26, %c0_27] : memref<1x32xf32, #tpu.memory_space<vmem>>, vector<1x32xf32>
    %107 = vector.broadcast %106 : vector<1x32xf32> to vector<8x32xf32>
    %108 = arith.addf %105, %107 : vector<8x32xf32>
    %109 = arith.addf %1, %108 : vector<8x32xf32>
    %c0_28 = arith.constant 0 : index
    %c0_29 = arith.constant 0 : index
    %110 = vector.load %arg8[%c0_28, %c0_29] : memref<1x32xf32, #tpu.memory_space<vmem>>, vector<1x32xf32>
    %c0_30 = arith.constant 0 : index
    %c0_31 = arith.constant 0 : index
    %111 = vector.load %arg9[%c0_30, %c0_31] : memref<1x32xf32, #tpu.memory_space<vmem>>, vector<1x32xf32>
    %cst_32 = arith.constant dense<0.000000e+00> : vector<8xf32>
    %112 = vector.multi_reduction <add>, %109, %cst_32 [1] : vector<8x32xf32> to vector<8xf32>
    %113 = vector.shape_cast %112 : vector<8xf32> to vector<8x1xf32>
    %cst_33 = arith.constant 3.200000e+01 : f32
    %114 = vector.broadcast %cst_33 : f32 to vector<8x1xf32>
    %115 = arith.divf %113, %114 : vector<8x1xf32>
    %116 = vector.broadcast %115 : vector<8x1xf32> to vector<8x32xf32>
    %117 = arith.subf %109, %116 : vector<8x32xf32>
    %118 = arith.mulf %117, %117 : vector<8x32xf32>
    %cst_34 = arith.constant dense<0.000000e+00> : vector<8xf32>
    %119 = vector.multi_reduction <add>, %118, %cst_34 [1] : vector<8x32xf32> to vector<8xf32>
    %120 = vector.shape_cast %119 : vector<8xf32> to vector<8x1xf32>
    %cst_35 = arith.constant 3.200000e+01 : f32
    %121 = vector.broadcast %cst_35 : f32 to vector<8x1xf32>
    %122 = arith.divf %120, %121 : vector<8x1xf32>
    %123 = vector.broadcast %115 : vector<8x1xf32> to vector<8x32xf32>
    %124 = arith.subf %109, %123 : vector<8x32xf32>
    %cst_36 = arith.constant 9.99999974E-6 : f32
    %125 = vector.broadcast %cst_36 : f32 to vector<8x1xf32>
    %126 = arith.addf %122, %125 : vector<8x1xf32>
    %127 = math.rsqrt %126 : vector<8x1xf32>
    %128 = vector.broadcast %127 : vector<8x1xf32> to vector<8x32xf32>
    %129 = arith.mulf %124, %128 : vector<8x32xf32>
    %130 = vector.broadcast %110 : vector<1x32xf32> to vector<8x32xf32>
    %131 = arith.mulf %129, %130 : vector<8x32xf32>
    %132 = vector.broadcast %111 : vector<1x32xf32> to vector<8x32xf32>
    %133 = arith.addf %131, %132 : vector<8x32xf32>
    %134 = arith.truncf %133 : vector<8x32xf32> to vector<8x32xbf16>
    %c0_37 = arith.constant 0 : index
    %c0_38 = arith.constant 0 : index
    %135 = vector.load %arg10[%c0_37, %c0_38] : memref<32x128xbf16, #tpu.memory_space<vmem>>, vector<32x128xbf16>
    %cst_39 = arith.constant dense<0.000000e+00> : vector<8x128xf32>
    %136 = tpu.matmul %134, %135, %cst_39 {dimension_numbers = #tpu.dot_dimension_numbers<[1], [0], [0], [1], [0, 0, 1, 1], [], []>} : vector<8x32xbf16>, vector<32x128xbf16>, vector<8x128xf32> -> vector<8x128xf32>
    %c0_40 = arith.constant 0 : index
    %c0_41 = arith.constant 0 : index
    %137 = vector.load %arg11[%c0_40, %c0_41] : memref<1x128xf32, #tpu.memory_space<vmem>>, vector<1x128xf32>
    %138 = vector.broadcast %137 : vector<1x128xf32> to vector<8x128xf32>
    %139 = arith.addf %136, %138 : vector<8x128xf32>
    %140 = arith.mulf %139, %139 : vector<8x128xf32>
    %141 = arith.mulf %139, %140 : vector<8x128xf32>
    %cst_42 = arith.constant 4.471500e-02 : f32
    %142 = vector.broadcast %cst_42 : f32 to vector<8x128xf32>
    %143 = arith.mulf %142, %141 : vector<8x128xf32>
    %144 = arith.addf %139, %143 : vector<8x128xf32>
    %cst_43 = arith.constant 0.797884583 : f32
    %145 = vector.broadcast %cst_43 : f32 to vector<8x128xf32>
    %146 = arith.mulf %145, %144 : vector<8x128xf32>
    %147 = math.tanh %146 : vector<8x128xf32>
    %cst_44 = arith.constant 1.000000e+00 : f32
    %148 = vector.broadcast %cst_44 : f32 to vector<8x128xf32>
    %149 = arith.addf %148, %147 : vector<8x128xf32>
    %cst_45 = arith.constant 5.000000e-01 : f32
    %150 = vector.broadcast %cst_45 : f32 to vector<8x128xf32>
    %151 = arith.mulf %150, %149 : vector<8x128xf32>
    %152 = arith.mulf %139, %151 : vector<8x128xf32>
    %153 = arith.truncf %152 : vector<8x128xf32> to vector<8x128xbf16>
    %c0_46 = arith.constant 0 : index
    %c0_47 = arith.constant 0 : index
    %154 = vector.load %arg12[%c0_46, %c0_47] : memref<128x32xbf16, #tpu.memory_space<vmem>>, vector<128x32xbf16>
    %cst_48 = arith.constant dense<0.000000e+00> : vector<8x32xf32>
    %155 = tpu.matmul %153, %154, %cst_48 {dimension_numbers = #tpu.dot_dimension_numbers<[1], [0], [0], [1], [0, 0, 1, 1], [], []>} : vector<8x128xbf16>, vector<128x32xbf16>, vector<8x32xf32> -> vector<8x32xf32>
    %c0_49 = arith.constant 0 : index
    %c0_50 = arith.constant 0 : index
    %156 = vector.load %arg13[%c0_49, %c0_50] : memref<1x32xf32, #tpu.memory_space<vmem>>, vector<1x32xf32>
    %157 = vector.broadcast %156 : vector<1x32xf32> to vector<8x32xf32>
    %158 = arith.addf %155, %157 : vector<8x32xf32>
    %159 = arith.addf %109, %158 : vector<8x32xf32>
    %c0_51 = arith.constant 0 : index
    %c0_52 = arith.constant 0 : index
    %c0_53 = arith.constant 0 : index
    %160 = vector.load %arg16[%c0_51, %c0_52, %c0_53] : memref<1x8x32xf32, #tpu.memory_space<vmem>>, vector<1x8x32xf32>
    %161 = vector.shape_cast %160 : vector<1x8x32xf32> to vector<8x32xf32>
    %162 = vector.shape_cast %159 : vector<8x32xf32> to vector<1x8x32xf32>
    tpu.vector_store %arg16[%c0_51, %c0_52, %c0_53], %162 {strides = array<i32>} : memref<1x8x32xf32, #tpu.memory_space<vmem>>, vector<1x8x32xf32>,
    return
  }
  func.func @transform_0(%arg0: i32) -> (i32, i32, i32) {
    %c0_i32 = arith.constant 0 : i32
    %c0_i32_0 = arith.constant 0 : i32
    %c0_i32_1 = arith.constant 0 : i32
    return %arg0, %c0_i32, %c0_i32_0 : i32, i32, i32
  }
  func.func @transform_1(%arg0: i32) -> (i32, i32) {
    %c0_i32 = arith.constant 0 : i32
    %c0_i32_0 = arith.constant 0 : i32
    %c0_i32_1 = arith.constant 0 : i32
    return %c0_i32, %c0_i32_0 : i32, i32
  }
  func.func @transform_2(%arg0: i32) -> (i32, i32) {
    %c0_i32 = arith.constant 0 : i32
    %c0_i32_0 = arith.constant 0 : i32
    %c0_i32_1 = arith.constant 0 : i32
    return %c0_i32, %c0_i32_0 : i32, i32
  }
  func.func @transform_3(%arg0: i32) -> (i32, i32) {
    %c0_i32 = arith.constant 0 : i32
    %c0_i32_0 = arith.constant 0 : i32
    %c0_i32_1 = arith.constant 0 : i32
    return %c0_i32, %c0_i32_0 : i32, i32
  }
  func.func @transform_4(%arg0: i32) -> (i32, i32) {
    %c0_i32 = arith.constant 0 : i32
    %c0_i32_0 = arith.constant 0 : i32
    %c0_i32_1 = arith.constant 0 : i32
    return %c0_i32, %c0_i32_0 : i32, i32
  }
  func.func @transform_5(%arg0: i32) -> (i32, i32) {
    %c0_i32 = arith.constant 0 : i32
    %c0_i32_0 = arith.constant 0 : i32
    %c0_i32_1 = arith.constant 0 : i32
    return %c0_i32, %c0_i32_0 : i32, i32
  }
  func.func @transform_6(%arg0: i32) -> (i32, i32) {
    %c0_i32 = arith.constant 0 : i32
    %c0_i32_0 = arith.constant 0 : i32
    %c0_i32_1 = arith.constant 0 : i32
    return %c0_i32, %c0_i32_0 : i32, i32
  }
  func.func @transform_7(%arg0: i32) -> (i32, i32) {
    %c0_i32 = arith.constant 0 : i32
    %c0_i32_0 = arith.constant 0 : i32
    %c0_i32_1 = arith.constant 0 : i32
    return %c0_i32, %c0_i32_0 : i32, i32
  }
  func.func @transform_8(%arg0: i32) -> (i32, i32) {
    %c0_i32 = arith.constant 0 : i32
    %c0_i32_0 = arith.constant 0 : i32
    %c0_i32_1 = arith.constant 0 : i32
    return %c0_i32, %c0_i32_0 : i32, i32
  }
  func.func @transform_9(%arg0: i32) -> (i32, i32) {
    %c0_i32 = arith.constant 0 : i32
    %c0_i32_0 = arith.constant 0 : i32
    %c0_i32_1 = arith.constant 0 : i32
    return %c0_i32, %c0_i32_0 : i32, i32
  }
  func.func @transform_10(%arg0: i32) -> (i32, i32) {
    %c0_i32 = arith.constant 0 : i32
    %c0_i32_0 = arith.constant 0 : i32
    %c0_i32_1 = arith.constant 0 : i32
    return %c0_i32, %c0_i32_0 : i32, i32
  }
  func.func @transform_11(%arg0: i32) -> (i32, i32) {
    %c0_i32 = arith.constant 0 : i32
    %c0_i32_0 = arith.constant 0 : i32
    %c0_i32_1 = arith.constant 0 : i32
    return %c0_i32, %c0_i32_0 : i32, i32
  }
  func.func @transform_12(%arg0: i32) -> (i32, i32) {
    %c0_i32 = arith.constant 0 : i32
    %c0_i32_0 = arith.constant 0 : i32
    %c0_i32_1 = arith.constant 0 : i32
    return %c0_i32, %c0_i32_0 : i32, i32
  }
  func.func @transform_13(%arg0: i32) -> (i32, i32) {
    %c0_i32 = arith.constant 0 : i32
    %c0_i32_0 = arith.constant 0 : i32
    %c0_i32_1 = arith.constant 0 : i32
    return %c0_i32, %c0_i32_0 : i32, i32
  }
  func.func @transform_14(%arg0: i32) -> (i32, i32) {
    %c0_i32 = arith.constant 0 : i32
    %c0_i32_0 = arith.constant 0 : i32
    %c0_i32_1 = arith.constant 0 : i32
    return %c0_i32, %c0_i32_0 : i32, i32
  }
  func.func @transform_15(%arg0: i32) -> (i32, i32, i32) {
    %c0_i32 = arith.constant 0 : i32
    %c0_i32_0 = arith.constant 0 : i32
    %c0_i32_1 = arith.constant 0 : i32
    return %arg0, %c0_i32, %c0_i32_0 : i32, i32, i32
  }
}

</mosaic_0001>

<llo_original>
// kernel: tpu_custom_call.1
$region0: #{tpu_custom_call.1}
  #allocation0 [shape = 'u32[]', space=smem, size = 0x4, offset = 0x4, fixed_abs, tag = 'smem constant byte address 0x4 - core index']
  #allocation1 [shape = 'u32[144,128]{1,0:T(1,128)}', space=vmem, size = 0x12000, scoped, tag = 'internal scratch']
  %s0 = inlined_call_operand.vmem [shape: f32[2,8,32], index: 0, kind: input, shape index: {}]
  %s1 = inlined_call_operand.vmem [shape: f32[1,32], index: 1, kind: input, shape index: {}]
  %s2 = inlined_call_operand.vmem [shape: f32[1,32], index: 2, kind: input, shape index: {}]
  %s3 = inlined_call_operand.vmem [shape: bf16[32,96], index: 3, kind: input, shape index: {}]
  %s4 = inlined_call_operand.vmem [shape: f32[1,96], index: 4, kind: input, shape index: {}]
  %s5 = inlined_call_operand.vmem [shape: bf16[32,32], index: 5, kind: input, shape index: {}]
  %s6 = inlined_call_operand.vmem [shape: f32[1,32], index: 6, kind: input, shape index: {}]
  %s7 = inlined_call_operand.vmem [shape: f32[1,32], index: 7, kind: input, shape index: {}]
  %s8 = inlined_call_operand.vmem [shape: f32[1,32], index: 8, kind: input, shape index: {}]
  %s9 = inlined_call_operand.vmem [shape: bf16[32,128], index: 9, kind: input, shape index: {}]
  %s10 = inlined_call_operand.vmem [shape: f32[1,128], index: 10, kind: input, shape index: {}]
  %s11 = inlined_call_operand.vmem [shape: bf16[128,32], index: 11, kind: input, shape index: {}]
  %s12 = inlined_call_operand.vmem [shape: f32[1,32], index: 12, kind: input, shape index: {}]
  %s13 = inlined_call_operand.vmem [shape: f32[1,32], index: 13, kind: input, shape index: {}]
  %s14 = inlined_call_operand.vmem [shape: f32[1,32], index: 14, kind: input, shape index: {}]
  %s15 = inlined_call_operand.hbm [shape: f32[2,8,32], index: 15, kind: output, shape index: {}]
  %s16 = sld [smem:[#allocation0]]
  $region93: #{tpu_custom_call.1} parent=0
    _
  %s18 = ssub.s32 1, %s16
  %s19 = scalar_select 0, %s18, %s16
  $region1: #{tpu_custom_call.1} parent=0
    #allocation2 [shape = 'u8[8192]{0}', space=vmem, size = 0x2000, scoped, tag = 'output window, operand 0']
    #allocation3 [shape = 's32[2]{0}', space=sflag, size = 0x8, scoped, tag = 'scoped memory for tpu_custom_call.1']
    %20 = vsyncpa [#allocation3], 0
    %s21 = scalar_lea.sflag [#allocation3], 1
    %22 = vsyncpa %s21, 0
    loop: start=0, step=1, limit=4
    $region2: #{tpu_custom_call.1} parent=1 // loop_pre_header
      _
    $region3: #{tpu_custom_call.1} parent=1 // loop_header
      %s24 = sphi 0, %s28
      %p25 = scmp.ge.s32.totalorder %s24, 4
      %s34 = sphi 0, %s36
      %s37 = sphi 0, %s34
      %s38 = sphi 0, %s37
      %s54 = sphi 0, %s38
      %s58 = sphi 0, %s58
      %s60 = sphi 0, %s58
      %s61 = sphi 0, %s60
      %s75 = sphi 0, %s61
      %s79 = sphi 0, %s79
      %s81 = sphi 0, %s79
      %s82 = sphi 0, %s81
      %s96 = sphi 0, %s82
      %s100 = sphi 0, %s100
      %s102 = sphi 0, %s100
      %s103 = sphi 0, %s102
      %s117 = sphi 0, %s103
      %s121 = sphi 0, %s121
      %s123 = sphi 0, %s121
      %s124 = sphi 0, %s123
      %s138 = sphi 0, %s124
      %s142 = sphi 0, %s142
      %s144 = sphi 0, %s142
      %s145 = sphi 0, %s144
      %s159 = sphi 0, %s145
      %s163 = sphi 0, %s163
      %s165 = sphi 0, %s163
      %s166 = sphi 0, %s165
      %s180 = sphi 0, %s166
      %s184 = sphi 0, %s184
      %s186 = sphi 0, %s184
      %s187 = sphi 0, %s186
      %s201 = sphi 0, %s187
      %s205 = sphi 0, %s205
      %s207 = sphi 0, %s205
      %s208 = sphi 0, %s207
      %s222 = sphi 0, %s208
      %s226 = sphi 0, %s226
      %s228 = sphi 0, %s226
      %s229 = sphi 0, %s228
      %s243 = sphi 0, %s229
      %s247 = sphi 0, %s247
      %s249 = sphi 0, %s247
      %s250 = sphi 0, %s249
      %s264 = sphi 0, %s250
      %s268 = sphi 0, %s268
      %s270 = sphi 0, %s268
      %s271 = sphi 0, %s270
      %s285 = sphi 0, %s271
      %s289 = sphi 0, %s289
      %s291 = sphi 0, %s289
      %s292 = sphi 0, %s291
      %s306 = sphi 0, %s292
      %s310 = sphi 0, %s310
      %s312 = sphi 0, %s310
      %s313 = sphi 0, %s312
      %s327 = sphi 0, %s313
      %s331 = sphi 0, %s331
      %s333 = sphi 0, %s331
      %s334 = sphi 0, %s333
      %s348 = sphi 0, %s334
      %s354 = sphi 0, %s356
      %s357 = sphi 0, %s354
      %s358 = sphi 0, %s357
      %s374 = sphi 0, %s358
    $region4: #{tpu_custom_call.1} parent=1 // loop_header_branch
      %27 = sbr.rel (%p25) target = $region8
    $region5: #{tpu_custom_call.1} parent=1 // loop_body
      %s29 = ssub.s32 %s24, 1
      %s30 = ssub.s32 %s24, 2
      %s31 = sadd.s32 %s24, 1
      %s32 = ssub.s32 %s24, %s31
      %p33 = scmp.eq.s32.totalorder %s32, 0
      %s35 = sadd.s32 %s34, 1
      %s36 = scalar_select %p33, %s34, %s35
      %p39 = pneg %p33
      %p40 = scmp.eq.s32.totalorder %s24, 1
      %p41 = por %p39, %p40
      %p42 = scmp.ne.s32.totalorder %s34, %s37
      %p43 = scmp.eq.s32.totalorder %s24, 0
      %p44 = por %p42, %p43
      %p45 = scmp.ne.s32.totalorder %s34, %s37
      %p46 = scmp.eq.s32.totalorder %s29, 1
      %p47 = por %p45, %p46
      %p48 = scmp.ne.s32.totalorder %s37, %s38
      %p49 = scmp.eq.s32.totalorder %s29, 0
      %p50 = por %p48, %p49
      %p51 = scmp.ne.s32.totalorder %s37, %s38
      %p52 = scmp.eq.s32.totalorder %s30, 1
      %p53 = por %p51, %p52
      %p55 = scmp.ne.s32.totalorder %s38, %s54
      %p56 = scmp.eq.s32.totalorder %s30, 0
      %p57 = por %p55, %p56
      %s59 = sadd.s32 %s58, 1
      %p62 = scmp.eq.s32.totalorder %s24, 1
      %p63 = scmp.ne.s32.totalorder %s58, %s60
      %p64 = scmp.eq.s32.totalorder %s24, 0
      %p65 = por %p63, %p64
      %p66 = scmp.ne.s32.totalorder %s58, %s60
      %p67 = scmp.eq.s32.totalorder %s29, 1
      %p68 = por %p66, %p67
      %p69 = scmp.ne.s32.totalorder %s60, %s61
      %p70 = scmp.eq.s32.totalorder %s29, 0
      %p71 = por %p69, %p70
      %p72 = scmp.ne.s32.totalorder %s60, %s61
      %p73 = scmp.eq.s32.totalorder %s30, 1
      %p74 = por %p72, %p73
      %p76 = scmp.ne.s32.totalorder %s61, %s75
      %p77 = scmp.eq.s32.totalorder %s30, 0
      %p78 = por %p76, %p77
      %s80 = sadd.s32 %s79, 1
      %p83 = scmp.eq.s32.totalorder %s24, 1
      %p84 = scmp.ne.s32.totalorder %s79, %s81
      %p85 = scmp.eq.s32.totalorder %s24, 0
      %p86 = por %p84, %p85
      %p87 = scmp.ne.s32.totalorder %s79, %s81
      %p88 = scmp.eq.s32.totalorder %s29, 1
      %p89 = por %p87, %p88
      %p90 = scmp.ne.s32.totalorder %s81, %s82
      %p91 = scmp.eq.s32.totalorder %s29, 0
      %p92 = por %p90, %p91
      %p93 = scmp.ne.s32.totalorder %s81, %s82
      %p94 = scmp.eq.s32.totalorder %s30, 1
      %p95 = por %p93, %p94
      %p97 = scmp.ne.s32.totalorder %s82, %s96
      %p98 = scmp.eq.s32.totalorder %s30, 0
      %p99 = por %p97, %p98
      %s101 = sadd.s32 %s100, 1
      %p104 = scmp.eq.s32.totalorder %s24, 1
      %p105 = scmp.ne.s32.totalorder %s100, %s102
      %p106 = scmp.eq.s32.totalorder %s24, 0
      %p107 = por %p105, %p106
      %p108 = scmp.ne.s32.totalorder %s100, %s102
      %p109 = scmp.eq.s32.totalorder %s29, 1
      %p110 = por %p108, %p109
      %p111 = scmp.ne.s32.totalorder %s102, %s103
      %p112 = scmp.eq.s32.totalorder %s29, 0
      %p113 = por %p111, %p112
      %p114 = scmp.ne.s32.totalorder %s102, %s103
      %p115 = scmp.eq.s32.totalorder %s30, 1
      %p116 = por %p114, %p115
      %p118 = scmp.ne.s32.totalorder %s103, %s117
      %p119 = scmp.eq.s32.totalorder %s30, 0
      %p120 = por %p118, %p119
      %s122 = sadd.s32 %s121, 1
      %p125 = scmp.eq.s32.totalorder %s24, 1
      %p126 = scmp.ne.s32.totalorder %s121, %s123
      %p127 = scmp.eq.s32.totalorder %s24, 0
      %p128 = por %p126, %p127
      %p129 = scmp.ne.s32.totalorder %s121, %s123
      %p130 = scmp.eq.s32.totalorder %s29, 1
      %p131 = por %p129, %p130
      %p132 = scmp.ne.s32.totalorder %s123, %s124
      %p133 = scmp.eq.s32.totalorder %s29, 0
      %p134 = por %p132, %p133
      %p135 = scmp.ne.s32.totalorder %s123, %s124
      %p136 = scmp.eq.s32.totalorder %s30, 1
      %p137 = por %p135, %p136
      %p139 = scmp.ne.s32.totalorder %s124, %s138
      %p140 = scmp.eq.s32.totalorder %s30, 0
      %p141 = por %p139, %p140
      %s143 = sadd.s32 %s142, 1
      %p146 = scmp.eq.s32.totalorder %s24, 1
      %p147 = scmp.ne.s32.totalorder %s142, %s144
      %p148 = scmp.eq.s32.totalorder %s24, 0
      %p149 = por %p147, %p148
      %p150 = scmp.ne.s32.totalorder %s142, %s144
      %p151 = scmp.eq.s32.totalorder %s29, 1
      %p152 = por %p150, %p151
      %p153 = scmp.ne.s32.totalorder %s144, %s145
      %p154 = scmp.eq.s32.totalorder %s29, 0
      %p155 = por %p153, %p154
      %p156 = scmp.ne.s32.totalorder %s144, %s145
      %p157 = scmp.eq.s32.totalorder %s30, 1
      %p158 = por %p156, %p157
      %p160 = scmp.ne.s32.totalorder %s145, %s159
      %p161 = scmp.eq.s32.totalorder %s30, 0
      %p162 = por %p160, %p161
      %s164 = sadd.s32 %s163, 1
      %p167 = scmp.eq.s32.totalorder %s24, 1
      %p168 = scmp.ne.s32.totalorder %s163, %s165
      %p169 = scmp.eq.s32.totalorder %s24, 0
      %p170 = por %p168, %p169
      %p171 = scmp.ne.s32.totalorder %s163, %s165
      %p172 = scmp.eq.s32.totalorder %s29, 1
      %p173 = por %p171, %p172
      %p174 = scmp.ne.s32.totalorder %s165, %s166
      %p175 = scmp.eq.s32.totalorder %s29, 0
      %p176 = por %p174, %p175
      %p177 = scmp.ne.s32.totalorder %s165, %s166
      %p178 = scmp.eq.s32.totalorder %s30, 1
      %p179 = por %p177, %p178
      %p181 = scmp.ne.s32.totalorder %s166, %s180
      %p182 = scmp.eq.s32.totalorder %s30, 0
      %p183 = por %p181, %p182
      %s185 = sadd.s32 %s184, 1
      %p188 = scmp.eq.s32.totalorder %s24, 1
      %p189 = scmp.ne.s32.totalorder %s184, %s186
      %p190 = scmp.eq.s32.totalorder %s24, 0
      %p191 = por %p189, %p190
      %p192 = scmp.ne.s32.totalorder %s184, %s186
      %p193 = scmp.eq.s32.totalorder %s29, 1
      %p194 = por %p192, %p193
      %p195 = scmp.ne.s32.totalorder %s186, %s187
      %p196 = scmp.eq.s32.totalorder %s29, 0
      %p197 = por %p195, %p196
      %p198 = scmp.ne.s32.totalorder %s186, %s187
      %p199 = scmp.eq.s32.totalorder %s30, 1
      %p200 = por %p198, %p199
      %p202 = scmp.ne.s32.totalorder %s187, %s201
      %p203 = scmp.eq.s32.totalorder %s30, 0
      %p204 = por %p202, %p203
      %s206 = sadd.s32 %s205, 1
      %p209 = scmp.eq.s32.totalorder %s24, 1
      %p210 = scmp.ne.s32.totalorder %s205, %s207
      %p211 = scmp.eq.s32.totalorder %s24, 0
      %p212 = por %p210, %p211
      %p213 = scmp.ne.s32.totalorder %s205, %s207
      %p214 = scmp.eq.s32.totalorder %s29, 1
      %p215 = por %p213, %p214
      %p216 = scmp.ne.s32.totalorder %s207, %s208
      %p217 = scmp.eq.s32.totalorder %s29, 0
      %p218 = por %p216, %p217
      %p219 = scmp.ne.s32.totalorder %s207, %s208
      %p220 = scmp.eq.s32.totalorder %s30, 1
      %p221 = por %p219, %p220
      %p223 = scmp.ne.s32.totalorder %s208, %s222
      %p224 = scmp.eq.s32.totalorder %s30, 0
      %p225 = por %p223, %p224
      %s227 = sadd.s32 %s226, 1
      %p230 = scmp.eq.s32.totalorder %s24, 1
      %p231 = scmp.ne.s32.totalorder %s226, %s228
      %p232 = scmp.eq.s32.totalorder %s24, 0
      %p233 = por %p231, %p232
      %p234 = scmp.ne.s32.totalorder %s226, %s228
      %p235 = scmp.eq.s32.totalorder %s29, 1
      %p236 = por %p234, %p235
      %p237 = scmp.ne.s32.totalorder %s228, %s229
      %p238 = scmp.eq.s32.totalorder %s29, 0
      %p239 = por %p237, %p238
      %p240 = scmp.ne.s32.totalorder %s228, %s229
      %p241 = scmp.eq.s32.totalorder %s30, 1
      %p242 = por %p240, %p241
      %p244 = scmp.ne.s32.totalorder %s229, %s243
      %p245 = scmp.eq.s32.totalorder %s30, 0
      %p246 = por %p244, %p245
      %s248 = sadd.s32 %s247, 1
      %p251 = scmp.eq.s32.totalorder %s24, 1
      %p252 = scmp.ne.s32.totalorder %s247, %s249
      %p253 = scmp.eq.s32.totalorder %s24, 0
      %p254 = por %p252, %p253
      %p255 = scmp.ne.s32.totalorder %s247, %s249
      %p256 = scmp.eq.s32.totalorder %s29, 1
      %p257 = por %p255, %p256
      %p258 = scmp.ne.s32.totalorder %s249, %s250
      %p259 = scmp.eq.s32.totalorder %s29, 0
      %p260 = por %p258, %p259
      %p261 = scmp.ne.s32.totalorder %s249, %s250
      %p262 = scmp.eq.s32.totalorder %s30, 1
      %p263 = por %p261, %p262
      %p265 = scmp.ne.s32.totalorder %s250, %s264
      %p266 = scmp.eq.s32.totalorder %s30, 0
      %p267 = por %p265, %p266
      %s269 = sadd.s32 %s268, 1
      %p272 = scmp.eq.s32.totalorder %s24, 1
      %p273 = scmp.ne.s32.totalorder %s268, %s270
      %p274 = scmp.eq.s32.totalorder %s24, 0
      %p275 = por %p273, %p274
      %p276 = scmp.ne.s32.totalorder %s268, %s270
      %p277 = scmp.eq.s32.totalorder %s29, 1
      %p278 = por %p276, %p277
      %p279 = scmp.ne.s32.totalorder %s270, %s271
      %p280 = scmp.eq.s32.totalorder %s29, 0
      %p281 = por %p279, %p280
      %p282 = scmp.ne.s32.totalorder %s270, %s271
      %p283 = scmp.eq.s32.totalorder %s30, 1
      %p284 = por %p282, %p283
      %p286 = scmp.ne.s32.totalorder %s271, %s285
      %p287 = scmp.eq.s32.totalorder %s30, 0
      %p288 = por %p286, %p287
      %s290 = sadd.s32 %s289, 1
      %p293 = scmp.eq.s32.totalorder %s24, 1
      %p294 = scmp.ne.s32.totalorder %s289, %s291
      %p295 = scmp.eq.s32.totalorder %s24, 0
      %p296 = por %p294, %p295
      %p297 = scmp.ne.s32.totalorder %s289, %s291
      %p298 = scmp.eq.s32.totalorder %s29, 1
      %p299 = por %p297, %p298
      %p300 = scmp.ne.s32.totalorder %s291, %s292
      %p301 = scmp.eq.s32.totalorder %s29, 0
      %p302 = por %p300, %p301
      %p303 = scmp.ne.s32.totalorder %s291, %s292
      %p304 = scmp.eq.s32.totalorder %s30, 1
      %p305 = por %p303, %p304
      %p307 = scmp.ne.s32.totalorder %s292, %s306
      %p308 = scmp.eq.s32.totalorder %s30, 0
      %p309 = por %p307, %p308
      %s311 = sadd.s32 %s310, 1
      %p314 = scmp.eq.s32.totalorder %s24, 1
      %p315 = scmp.ne.s32.totalorder %s310, %s312
      %p316 = scmp.eq.s32.totalorder %s24, 0
      %p317 = por %p315, %p316
      %p318 = scmp.ne.s32.totalorder %s310, %s312
      %p319 = scmp.eq.s32.totalorder %s29, 1
      %p320 = por %p318, %p319
      %p321 = scmp.ne.s32.totalorder %s312, %s313
      %p322 = scmp.eq.s32.totalorder %s29, 0
      %p323 = por %p321, %p322
      %p324 = scmp.ne.s32.totalorder %s312, %s313
      %p325 = scmp.eq.s32.totalorder %s30, 1
      %p326 = por %p324, %p325
      %p328 = scmp.ne.s32.totalorder %s313, %s327
      %p329 = scmp.eq.s32.totalorder %s30, 0
      %p330 = por %p328, %p329
      %s332 = sadd.s32 %s331, 1
      %p335 = scmp.eq.s32.totalorder %s24, 1
      %p336 = scmp.ne.s32.totalorder %s331, %s333
      %p337 = scmp.eq.s32.totalorder %s24, 0
      %p338 = por %p336, %p337
      %p339 = scmp.ne.s32.totalorder %s331, %s333
      %p340 = scmp.eq.s32.totalorder %s29, 1
      %p341 = por %p339, %p340
      %p342 = scmp.ne.s32.totalorder %s333, %s334
      %p343 = scmp.eq.s32.totalorder %s29, 0
      %p344 = por %p342, %p343
      %p345 = scmp.ne.s32.totalorder %s333, %s334
      %p346 = scmp.eq.s32.totalorder %s30, 1
      %p347 = por %p345, %p346
      %p349 = scmp.ne.s32.totalorder %s334, %s348
      %p350 = scmp.eq.s32.totalorder %s30, 0
      %p351 = por %p349, %p350
      %s352 = ssub.s32 %s24, %s31
      %p353 = scmp.eq.s32.totalorder %s352, 0
      %s355 = sadd.s32 %s354, 1
      %s356 = scalar_select %p353, %s354, %s355
      %p359 = pneg %p353
      %p360 = scmp.eq.s32.totalorder %s24, 1
      %p361 = por %p359, %p360
      %p362 = scmp.ne.s32.totalorder %s354, %s357
      %p363 = scmp.eq.s32.totalorder %s24, 0
      %p364 = por %p362, %p363
      %p365 = scmp.ne.s32.totalorder %s354, %s357
      %p366 = scmp.eq.s32.totalorder %s29, 1
      %p367 = por %p365, %p366
      %p368 = scmp.ne.s32.totalorder %s357, %s358
      %p369 = scmp.eq.s32.totalorder %s29, 0
      %p370 = por %p368, %p369
      %p371 = scmp.ne.s32.totalorder %s357, %s358
      %p372 = scmp.eq.s32.totalorder %s30, 1
      %p373 = por %p371, %p372
      %p375 = scmp.ne.s32.totalorder %s358, %s374
      %p376 = scmp.eq.s32.totalorder %s30, 0
      %p377 = por %p375, %p376
      %p378 = scmp.le.s32.totalorder 1, %s24
      %p379 = scmp.lt.s32.totalorder %s24, 3
      %p380 = pnand %p378, %p379
      %p381 = pneg %p380
      // Predicated region
      $region9: #{tpu_custom_call.1} parent=5 // pred_check
        _
      $region10: #{tpu_custom_call.1} parent=5 // pred_check_branch
        %383 = sbr.rel (%p380) target = $region12
      $region11: #{tpu_custom_call.1} parent=5 // pred_region
        %s384 = ssub.s32 %s24, 1
        // Predicated region
        $region13: #{tpu_custom_call.1} parent=11 // pred_check
          %p385 = pneg %p71
        $region14: #{tpu_custom_call.1} parent=11 // pred_check_branch
          %387 = sbr.rel (%p385) target = $region16
        $region15: #{tpu_custom_call.1} parent=11 // pred_region
          _
        $region16: #{tpu_custom_call.1} parent=11 // pred_fallthru
          _
        // Predicated region
        $region17: #{tpu_custom_call.1} parent=11 // pred_check
          %p388 = pneg %p92
        $region18: #{tpu_custom_call.1} parent=11 // pred_check_branch
          %390 = sbr.rel (%p388) target = $region20
        $region19: #{tpu_custom_call.1} parent=11 // pred_region
          _
        $region20: #{tpu_custom_call.1} parent=11 // pred_fallthru
          _
        // Predicated region
        $region21: #{tpu_custom_call.1} parent=11 // pred_check
          %p391 = pneg %p113
        $region22: #{tpu_custom_call.1} parent=11 // pred_check_branch
          %393 = sbr.rel (%p391) target = $region24
        $region23: #{tpu_custom_call.1} parent=11 // pred_region
          _
        $region24: #{tpu_custom_call.1} parent=11 // pred_fallthru
          _
        // Predicated region
        $region25: #{tpu_custom_call.1} parent=11 // pred_check
          %p394 = pneg %p134
        $region26: #{tpu_custom_call.1} parent=11 // pred_check_branch
          %396 = sbr.rel (%p394) target = $region28
        $region27: #{tpu_custom_call.1} parent=11 // pred_region
          _
        $region28: #{tpu_custom_call.1} parent=11 // pred_fallthru
          _
        // Predicated region
        $region29: #{tpu_custom_call.1} parent=11 // pred_check
          %p397 = pneg %p155
        $region30: #{tpu_custom_call.1} parent=11 // pred_check_branch
          %399 = sbr.rel (%p397) target = $region32
        $region31: #{tpu_custom_call.1} parent=11 // pred_region
          _
        $region32: #{tpu_custom_call.1} parent=11 // pred_fallthru
          _
        // Predicated region
        $region33: #{tpu_custom_call.1} parent=11 // pred_check
          %p400 = pneg %p176
        $region34: #{tpu_custom_call.1} parent=11 // pred_check_branch
          %402 = sbr.rel (%p400) target = $region36
        $region35: #{tpu_custom_call.1} parent=11 // pred_region
          _
        $region36: #{tpu_custom_call.1} parent=11 // pred_fallthru
          _
        // Predicated region
        $region37: #{tpu_custom_call.1} parent=11 // pred_check
          %p403 = pneg %p197
        $region38: #{tpu_custom_call.1} parent=11 // pred_check_branch
          %405 = sbr.rel (%p403) target = $region40
        $region39: #{tpu_custom_call.1} parent=11 // pred_region
          _
        $region40: #{tpu_custom_call.1} parent=11 // pred_fallthru
          _
        // Predicated region
        $region41: #{tpu_custom_call.1} parent=11 // pred_check
          %p406 = pneg %p218
        $region42: #{tpu_custom_call.1} parent=11 // pred_check_branch
          %408 = sbr.rel (%p406) target = $region44
        $region43: #{tpu_custom_call.1} parent=11 // pred_region
          _
        $region44: #{tpu_custom_call.1} parent=11 // pred_fallthru
          _
        // Predicated region
        $region45: #{tpu_custom_call.1} parent=11 // pred_check
          %p409 = pneg %p239
        $region46: #{tpu_custom_call.1} parent=11 // pred_check_branch
          %411 = sbr.rel (%p409) target = $region48
        $region47: #{tpu_custom_call.1} parent=11 // pred_region
          _
        $region48: #{tpu_custom_call.1} parent=11 // pred_fallthru
          _
        // Predicated region
        $region49: #{tpu_custom_call.1} parent=11 // pred_check
          %p412 = pneg %p260
        $region50: #{tpu_custom_call.1} parent=11 // pred_check_branch
          %414 = sbr.rel (%p412) target = $region52
        $region51: #{tpu_custom_call.1} parent=11 // pred_region
          _
        $region52: #{tpu_custom_call.1} parent=11 // pred_fallthru
          _
        // Predicated region
        $region53: #{tpu_custom_call.1} parent=11 // pred_check
          %p415 = pneg %p281
        $region54: #{tpu_custom_call.1} parent=11 // pred_check_branch
          %417 = sbr.rel (%p415) target = $region56
        $region55: #{tpu_custom_call.1} parent=11 // pred_region
          _
        $region56: #{tpu_custom_call.1} parent=11 // pred_fallthru
          _
        // Predicated region
        $region57: #{tpu_custom_call.1} parent=11 // pred_check
          %p418 = pneg %p302
        $region58: #{tpu_custom_call.1} parent=11 // pred_check_branch
          %420 = sbr.rel (%p418) target = $region60
        $region59: #{tpu_custom_call.1} parent=11 // pred_region
          _
        $region60: #{tpu_custom_call.1} parent=11 // pred_fallthru
          _
        // Predicated region
        $region61: #{tpu_custom_call.1} parent=11 // pred_check
          %p421 = pneg %p323
        $region62: #{tpu_custom_call.1} parent=11 // pred_check_branch
          %423 = sbr.rel (%p421) target = $region64
        $region63: #{tpu_custom_call.1} parent=11 // pred_region
          _
        $region64: #{tpu_custom_call.1} parent=11 // pred_fallthru
          _
        // Predicated region
        $region65: #{tpu_custom_call.1} parent=11 // pred_check
          %p424 = pneg %p344
        $region66: #{tpu_custom_call.1} parent=11 // pred_check_branch
          %426 = sbr.rel (%p424) target = $region68
        $region67: #{tpu_custom_call.1} parent=11 // pred_region
          _
        $region68: #{tpu_custom_call.1} parent=11 // pred_fallthru
          _
      $region12: #{tpu_custom_call.1} parent=5 // pred_fallthru
        _
      %p427 = scmp.lt.s32.totalorder %s24, 2
      // Predicated region
      $region69: #{tpu_custom_call.1} parent=5 // pred_check
        %p428 = pneg %p427
      $region70: #{tpu_custom_call.1} parent=5 // pred_check_branch
        %430 = sbr.rel (%p428) target = $region72
      $region71: #{tpu_custom_call.1} parent=5 // pred_region
        // Predicated region
        $region73: #{tpu_custom_call.1} parent=71 // pred_check
          %p431 = pneg %p44
        $region74: #{tpu_custom_call.1} parent=71 // pred_check_branch
          %433 = sbr.rel (%p431) target = $region76
        $region75: #{tpu_custom_call.1} parent=71 // pred_region
          %p434 = scmp.lt.s32.totalorder %s24, 1
          %s435 = scalar_select %p434, %s24, 1
          %s436 = smul.addr %s435, 8
          %s437 = scalar_lea.vmem %s0, %s436
        $region76: #{tpu_custom_call.1} parent=71 // pred_fallthru
          _
      $region72: #{tpu_custom_call.1} parent=5 // pred_fallthru
        _
      %p438 = scmp.le.s32.totalorder 1, %s24
      %p439 = scmp.lt.s32.totalorder %s24, 3
      %p440 = pnand %p438, %p439
      %p441 = pneg %p440
      // Predicated region
      $region77: #{tpu_custom_call.1} parent=5 // pred_check
        _
      $region78: #{tpu_custom_call.1} parent=5 // pred_check_branch
        %443 = sbr.rel (%p440) target = $region80
      $region79: #{tpu_custom_call.1} parent=5 // pred_region
        %s444 = ssub.s32 %s24, 1
        %p445 = scmp.lt.s32.totalorder %s29, 1
        %s446 = scalar_select %p445, %s29, 1
        %s447 = smul.addr %s446, 8
        %s448 = scalar_lea.vmem %s0, %s447
        %p449 = pneg %p50
        %p450 = pneg %p47
        %p451 = pneg %p71
        %p452 = pneg %p68
        %p453 = pneg %p92
        %p454 = pneg %p89
        %p455 = pneg %p113
        %p456 = pneg %p110
        %p457 = pneg %p134
        %p458 = pneg %p131
        %p459 = pneg %p155
        %p460 = pneg %p152
        %p461 = pneg %p176
        %p462 = pneg %p173
        %p463 = pneg %p197
        %p464 = pneg %p194
        %p465 = pneg %p218
        %p466 = pneg %p215
        %p467 = pneg %p239
        %p468 = pneg %p236
        %p469 = pneg %p260
        %p470 = pneg %p257
        %p471 = pneg %p281
        %p472 = pneg %p278
        %p473 = pneg %p302
        %p474 = pneg %p299
        %p475 = pneg %p323
        %p476 = pneg %p320
        %p477 = pneg %p344
        %p478 = pneg %p341
        %p479 = pneg %p370
        %p480 = pneg %p367
        %s481 = sand.u32 %s357, 1
        %s482 = scalar_lea.sflag [#allocation3], %s481
        %s483 = sand.u32 %s357, 1
        %s484 = smul.addr %s483, 8
        %s485 = scalar_lea.vmem [#allocation2], %s484
        %p486 = scmp.lt.s32.totalorder %s29, 1
        %s487 = scalar_select %p486, %s29, 1
        %s488 = smul.addr %s487, 8
        %s489 = scalar_lea.vmem %s0, %s488
        %v491 = vld [vmem:[%s489] sm:$0xff]
        %v492 = vld [vmem:[%s1] sm:$0x1]
        %v493 = vld [vmem:[%s2] sm:$0x1]
        %vm494 = vcmask 261120
        %v495 = vsel %vm494, %v491, 0.0
        %496 = vadd.xlane.f32.xlu0 %v495
        %v497 = vpop.xlane.xlu0 %496
        %v498 = vrcp.pop 32.0
        %v499 = vmul.f32 %v497, %v498
        %v500 = vsub.f32 %v491, %v499
        %v501 = vmul.f32 %v500, %v500
        %v502 = vsel %vm494, %v501, 0.0
        %503 = vadd.xlane.f32.xlu0 %v502
        %v504 = vpop.xlane.xlu0 %503
        %v505 = vmul.f32 %v504, %v498
        %v506 = vadd.f32 %v505, 1e-05
        %v507 = vrsqrt.pop %v506
        %v508 = vmul.f32 %v500, %v507
        %v510 = vlaneseq
        %v511 = vshrl.u32 %v510, 7
        %v512 = vsub.s32 0, %v511
        %v513 = vrot.slane %v492, %v512
        %v515 = vmul.f32 %v508, %v513
        %v517 = vlaneseq
        %v518 = vshrl.u32 %v517, 7
        %v519 = vsub.s32 0, %v518
        %v520 = vrot.slane %v493, %v519
        %v522 = vadd.f32 %v515, %v520
        %v523 = vpack.c.bf16 %v522, %v522
        %v524 = vld [vmem:[%s3] sm:$0xf]
        %v525 = vld [vmem:[%s3 + $0x4] sm:$0xf]
        %v526 = vld [vmem:[%s3 + $0x8] sm:$0xf]
        %v527 = vld [vmem:[%s3 + $0xc] sm:$0xf]
        %v528 = vld [vmem:[%s4] sm:$0x1]
        %v530 = vlaneseq
        %v531 = vshrl.u32 %v530, 7
        %v532 = vsub.s32 0, %v531
        %v533 = vrot.slane %v528, %v532
        %v539 = vunpack.c.l.b16 %v524
        %v540 = vunpack.c.l.b16 %v525
        %v541 = vunpack.c.l.b16 %v526
        %v542 = vunpack.c.l.b16 %v527
        %v543 = vpack.c.b16 %v540, %v539
        %v544 = vpack.c.b16 %v542, %v541
        %v548 = vsel %vm494, %v523, 0
        %550 = vmatprep.subr.bf16.mxu0 0
        %551 = vmatpush1.bf16.msra.mxu0 0
        %552 = vmatprep.subr.bf16.mxu0 0
        %553 = vmatpush1.bf16.msra.mxu0 0
        %554 = vmatprep.subr.bf16.mxu0 0
        %555 = vmatpush1.bf16.msra.mxu0 0
        %556 = vmatprep.subr.bf16.mxu0 0
        %557 = vmatpush1.bf16.msra.mxu0 0
        %558 = vmatprep.subr.bf16.mxu0 0
        %559 = vmatpush1.bf16.msra.mxu0 0
        %560 = vmatprep.subr.bf16.mxu0 0
        %561 = vmatpush1.bf16.msra.mxu0 0
        %562 = vmatprep.subr.bf16.mxu0 0
        %563 = vmatpush1.bf16.msra.mxu0 %v544
        %564 = vmatprep.subr.bf16.mxu0 0
        %565 = vmatpush1.bf16.msra.mxu0 %v543
        %566 = vmatprep.subr.bf16.mxu0 0
        %567 = vmatpush2.bf16.msra.mxu0 0
        %568 = vmatprep.subr.bf16.mxu0 0
        %569 = vmatpush2.bf16.msra.mxu0 0
        %570 = vmatprep.subr.bf16.mxu0 0
        %571 = vmatpush2.bf16.msra.mxu0 0
        %572 = vmatprep.subr.bf16.mxu0 0
        %573 = vmatpush2.bf16.msra.mxu0 0
        %574 = vmatprep.subr.bf16.mxu0 0
        %575 = vmatpush2.bf16.msra.mxu0 0
        %576 = vmatprep.subr.bf16.mxu0 0
        %577 = vmatpush2.bf16.msra.mxu0 0
        %578 = vmatprep.subr.bf16.mxu0 0
        %579 = vmatpush2.bf16.msra.mxu0 0
        %580 = vmatprep.subr.bf16.mxu0 0
        %581 = vmatpush2.bf16.msra.mxu0 0
        %582 = vmatprep.mubr.bf16.mxu0 0
        %583 = vmatmul.mubr.bf16.gmra.mxu0 %v548
        %v584 = vpop.f32.mrf.mxu0
        %v585 = vadd.f32 %v533, %v584
        %v586 = vpop.f32.mrf.mxu0
        %v587 = vpop.f32.mrf.mxu0
        %v588 = vpop.f32.mrf.mxu0
        %589 = vdwg.mxu0
        %591 = vrot.lane.b32.xlu0 %v585, 120
        %v592 = vpop.permute.xlu0 %591
        %594 = vrot.lane.b32.xlu0 %v585, 112
        %v595 = vpop.permute.xlu0 %594
        %597 = vrot.lane.b32.xlu0 %v585, 104
        %v598 = vpop.permute.xlu0 %597
        %v600 = vpack.c.bf16 %v585, %v585
        %v601 = vpack.c.bf16 %v592, %v592
        %v602 = vpack.c.bf16 %v595, %v595
        %v603 = vpack.c.bf16 %v598, %v598
        %605 = vrot.lane.b32.xlu0 %v600, 96
        %v606 = vpop.permute.xlu0 %605
        %vm607 = vcmask 64512
        %v609 = vsel %vm607, %v600, 0
        %v612 = vsel %vm607, %v606, 0
        %614 = vmatprep.subr.bf16.mxu0 0
        %615 = vmatpush1.bf16.xpose.msra.mxu0 0
        %616 = vmatprep.subr.bf16.mxu0 0
        %617 = vmatpush1.bf16.xpose.msra.mxu0 0
        %618 = vmatprep.subr.bf16.mxu0 0
        %619 = vmatpush1.bf16.xpose.msra.mxu0 0
        %620 = vmatprep.subr.bf16.mxu0 0
        %621 = vmatpush1.bf16.xpose.msra.mxu0 0
        %622 = vmatprep.subr.bf16.mxu0 0
        %623 = vmatpush1.bf16.xpose.msra.mxu0 0
        %624 = vmatprep.subr.bf16.mxu0 0
        %625 = vmatpush1.bf16.xpose.msra.mxu0 0
        %626 = vmatprep.subr.bf16.mxu0 0
        %627 = vmatpush1.bf16.xpose.msra.mxu0 0
        %628 = vmatprep.subr.bf16.mxu0 0
        %629 = vmatpush1.bf16.xpose.msra.mxu0 %v612
        %630 = vmatprep.subr.bf16.mxu0 0
        %631 = vmatpush2.bf16.xpose.msra.mxu0 0
        %632 = vmatprep.subr.bf16.mxu0 0
        %633 = vmatpush2.bf16.xpose.msra.mxu0 0
        %634 = vmatprep.subr.bf16.mxu0 0
        %635 = vmatpush2.bf16.xpose.msra.mxu0 0
        %636 = vmatprep.subr.bf16.mxu0 0
        %637 = vmatpush2.bf16.xpose.msra.mxu0 0
        %638 = vmatprep.subr.bf16.mxu0 0
        %639 = vmatpush2.bf16.xpose.msra.mxu0 0
        %640 = vmatprep.subr.bf16.mxu0 0
        %641 = vmatpush2.bf16.xpose.msra.mxu0 0
        %642 = vmatprep.subr.bf16.mxu0 0
        %643 = vmatpush2.bf16.xpose.msra.mxu0 0
        %644 = vmatprep.subr.bf16.mxu0 0
        %645 = vmatpush2.bf16.xpose.msra.mxu0 0
        %646 = vmatprep.mubr.bf16.mxu0 0
        %647 = vmatmul.mubr.bf16.gmra.mxu0 %v609
        %v648 = vpop.f32.mrf.mxu0
        %v649 = vadd.f32 0.0, %v648
        %v650 = vpop.f32.mrf.mxu0
        %v651 = vpop.f32.mrf.mxu0
        %v652 = vpop.f32.mrf.mxu0
        %653 = vdwg.mxu0
        %655 = vrot.lane.b32.xlu0 %v601, 96
        %v656 = vpop.permute.xlu0 %655
        %v658 = vsel %vm607, %v601, 0
        %v661 = vsel %vm607, %v656, 0
        %663 = vmatprep.subr.bf16.mxu0 0
        %664 = vmatpush1.bf16.xpose.msra.mxu0 0
        %665 = vmatprep.subr.bf16.mxu0 0
        %666 = vmatpush1.bf16.xpose.msra.mxu0 0
        %667 = vmatprep.subr.bf16.mxu0 0
        %668 = vmatpush1.bf16.xpose.msra.mxu0 0
        %669 = vmatprep.subr.bf16.mxu0 0
        %670 = vmatpush1.bf16.xpose.msra.mxu0 0
        %671 = vmatprep.subr.bf16.mxu0 0
        %672 = vmatpush1.bf16.xpose.msra.mxu0 0
        %673 = vmatprep.subr.bf16.mxu0 0
        %674 = vmatpush1.bf16.xpose.msra.mxu0 0
        %675 = vmatprep.subr.bf16.mxu0 0
        %676 = vmatpush1.bf16.xpose.msra.mxu0 0
        %677 = vmatprep.subr.bf16.mxu0 0
        %678 = vmatpush1.bf16.xpose.msra.mxu0 %v661
        %679 = vmatprep.subr.bf16.mxu0 0
        %680 = vmatpush2.bf16.xpose.msra.mxu0 0
        %681 = vmatprep.subr.bf16.mxu0 0
        %682 = vmatpush2.bf16.xpose.msra.mxu0 0
        %683 = vmatprep.subr.bf16.mxu0 0
        %684 = vmatpush2.bf16.xpose.msra.mxu0 0
        %685 = vmatprep.subr.bf16.mxu0 0
        %686 = vmatpush2.bf16.xpose.msra.mxu0 0
        %687 = vmatprep.subr.bf16.mxu0 0
        %688 = vmatpush2.bf16.xpose.msra.mxu0 0
        %689 = vmatprep.subr.bf16.mxu0 0
        %690 = vmatpush2.bf16.xpose.msra.mxu0 0
        %691 = vmatprep.subr.bf16.mxu0 0
        %692 = vmatpush2.bf16.xpose.msra.mxu0 0
        %693 = vmatprep.subr.bf16.mxu0 0
        %694 = vmatpush2.bf16.xpose.msra.mxu0 0
        %695 = vmatprep.mubr.bf16.mxu0 0
        %696 = vmatmul.mubr.bf16.gmra.mxu0 %v658
        %v697 = vpop.f32.mrf.mxu0
        %v698 = vadd.f32 0.0, %v697
        %v699 = vpop.f32.mrf.mxu0
        %v700 = vpop.f32.mrf.mxu0
        %v701 = vpop.f32.mrf.mxu0
        %702 = vdwg.mxu0
        %704 = vrot.lane.b32.xlu0 %v602, 96
        %v705 = vpop.permute.xlu0 %704
        %v707 = vsel %vm607, %v602, 0
        %v710 = vsel %vm607, %v705, 0
        %712 = vmatprep.subr.bf16.mxu0 0
        %713 = vmatpush1.bf16.xpose.msra.mxu0 0
        %714 = vmatprep.subr.bf16.mxu0 0
        %715 = vmatpush1.bf16.xpose.msra.mxu0 0
        %716 = vmatprep.subr.bf16.mxu0 0
        %717 = vmatpush1.bf16.xpose.msra.mxu0 0
        %718 = vmatprep.subr.bf16.mxu0 0
        %719 = vmatpush1.bf16.xpose.msra.mxu0 0
        %720 = vmatprep.subr.bf16.mxu0 0
        %721 = vmatpush1.bf16.xpose.msra.mxu0 0
        %722 = vmatprep.subr.bf16.mxu0 0
        %723 = vmatpush1.bf16.xpose.msra.mxu0 0
        %724 = vmatprep.subr.bf16.mxu0 0
        %725 = vmatpush1.bf16.xpose.msra.mxu0 0
        %726 = vmatprep.subr.bf16.mxu0 0
        %727 = vmatpush1.bf16.xpose.msra.mxu0 %v710
        %728 = vmatprep.subr.bf16.mxu0 0
        %729 = vmatpush2.bf16.xpose.msra.mxu0 0
        %730 = vmatprep.subr.bf16.mxu0 0
        %731 = vmatpush2.bf16.xpose.msra.mxu0 0
        %732 = vmatprep.subr.bf16.mxu0 0
        %733 = vmatpush2.bf16.xpose.msra.mxu0 0
        %734 = vmatprep.subr.bf16.mxu0 0
        %735 = vmatpush2.bf16.xpose.msra.mxu0 0
        %736 = vmatprep.subr.bf16.mxu0 0
        %737 = vmatpush2.bf16.xpose.msra.mxu0 0
        %738 = vmatprep.subr.bf16.mxu0 0
        %739 = vmatpush2.bf16.xpose.msra.mxu0 0
        %740 = vmatprep.subr.bf16.mxu0 0
        %741 = vmatpush2.bf16.xpose.msra.mxu0 0
        %742 = vmatprep.subr.bf16.mxu0 0
        %743 = vmatpush2.bf16.xpose.msra.mxu0 0
        %744 = vmatprep.mubr.bf16.mxu0 0
        %745 = vmatmul.mubr.bf16.gmra.mxu0 %v707
        %v746 = vpop.f32.mrf.mxu0
        %v747 = vadd.f32 0.0, %v746
        %v748 = vpop.f32.mrf.mxu0
        %v749 = vpop.f32.mrf.mxu0
        %v750 = vpop.f32.mrf.mxu0
        %751 = vdwg.mxu0
        %753 = vrot.lane.b32.xlu0 %v603, 96
        %v754 = vpop.permute.xlu0 %753
        %v756 = vsel %vm607, %v603, 0
        %v759 = vsel %vm607, %v754, 0
        %761 = vmatprep.subr.bf16.mxu0 0
        %762 = vmatpush1.bf16.xpose.msra.mxu0 0
        %763 = vmatprep.subr.bf16.mxu0 0
        %764 = vmatpush1.bf16.xpose.msra.mxu0 0
        %765 = vmatprep.subr.bf16.mxu0 0
        %766 = vmatpush1.bf16.xpose.msra.mxu0 0
        %767 = vmatprep.subr.bf16.mxu0 0
        %768 = vmatpush1.bf16.xpose.msra.mxu0 0
        %769 = vmatprep.subr.bf16.mxu0 0
        %770 = vmatpush1.bf16.xpose.msra.mxu0 0
        %771 = vmatprep.subr.bf16.mxu0 0
        %772 = vmatpush1.bf16.xpose.msra.mxu0 0
        %773 = vmatprep.subr.bf16.mxu0 0
        %774 = vmatpush1.bf16.xpose.msra.mxu0 0
        %775 = vmatprep.subr.bf16.mxu0 0
        %776 = vmatpush1.bf16.xpose.msra.mxu0 %v759
        %777 = vmatprep.subr.bf16.mxu0 0
        %778 = vmatpush2.bf16.xpose.msra.mxu0 0
        %779 = vmatprep.subr.bf16.mxu0 0
        %780 = vmatpush2.bf16.xpose.msra.mxu0 0
        %781 = vmatprep.subr.bf16.mxu0 0
        %782 = vmatpush2.bf16.xpose.msra.mxu0 0
        %783 = vmatprep.subr.bf16.mxu0 0
        %784 = vmatpush2.bf16.xpose.msra.mxu0 0
        %785 = vmatprep.subr.bf16.mxu0 0
        %786 = vmatpush2.bf16.xpose.msra.mxu0 0
        %787 = vmatprep.subr.bf16.mxu0 0
        %788 = vmatpush2.bf16.xpose.msra.mxu0 0
        %789 = vmatprep.subr.bf16.mxu0 0
        %790 = vmatpush2.bf16.xpose.msra.mxu0 0
        %791 = vmatprep.subr.bf16.mxu0 0
        %792 = vmatpush2.bf16.xpose.msra.mxu0 0
        %793 = vmatprep.mubr.bf16.mxu0 0
        %794 = vmatmul.mubr.bf16.gmra.mxu0 %v756
        %v795 = vpop.f32.mrf.mxu0
        %v796 = vadd.f32 0.0, %v795
        %v797 = vpop.f32.mrf.mxu0
        %v798 = vpop.f32.mrf.mxu0
        %v799 = vpop.f32.mrf.mxu0
        %800 = vdwg.mxu0
        %v801 = vlaneseq
        %v802 = vshrl.u32 %v801, 7
        %v803 = vlaneseq
        %v804 = vand.u32 %v803, 127
        %vm805 = vcmp.ge.s32.totalorder %v802, %v804
        %v806 = vsel %vm805, 1, 0
        %vm807 = vcmp.eq.s32.totalorder %v806, 1
        %v808 = vsel %vm807, %v649, -1e+30
        %v809 = vsel %vm807, %v698, -1e+30
        %v810 = vsel %vm807, %v747, -1e+30
        %v811 = vsel %vm807, %v796, -1e+30
        %v812 = vsel %vm607, %v808, -inf
        %813 = vmax.xlane.f32.xlu0 %v812
        %v814 = vpop.xlane.xlu0 %813
        %v815 = vsel %vm607, %v809, -inf
        %816 = vmax.xlane.f32.xlu0 %v815
        %v817 = vpop.xlane.xlu0 %816
        %v818 = vsel %vm607, %v810, -inf
        %819 = vmax.xlane.f32.xlu0 %v818
        %v820 = vpop.xlane.xlu0 %819
        %v821 = vsel %vm607, %v811, -inf
        %822 = vmax.xlane.f32.xlu0 %v821
        %v823 = vpop.xlane.xlu0 %822
        %v824 = vmax.f32 %v814, -1e+30
        %v825 = vmax.f32 %v817, -1e+30
        %v826 = vmax.f32 %v820, -1e+30
        %v827 = vmax.f32 %v823, -1e+30
        %v828 = vsub.f32 -1e+30, %v824
        %v829 = vsub.f32 -1e+30, %v825
        %v830 = vsub.f32 -1e+30, %v826
        %v831 = vsub.f32 -1e+30, %v827
        %v832 = vmul.f32 %v828, 1.442695
        %v833 = vpow.pop %v832
        %v834 = vmul.f32 %v829, 1.442695
        %v835 = vpow.pop %v834
        %v836 = vmul.f32 %v830, 1.442695
        %v837 = vpow.pop %v836
        %v838 = vmul.f32 %v831, 1.442695
        %v839 = vpow.pop %v838
        %v840 = vsub.f32 %v808, %v824
        %v841 = vsub.f32 %v809, %v825
        %v842 = vsub.f32 %v810, %v826
        %v843 = vsub.f32 %v811, %v827
        %v844 = vmul.f32 %v840, 1.442695
        %v845 = vpow.pop %v844
        %v846 = vmul.f32 %v841, 1.442695
        %v847 = vpow.pop %v846
        %v848 = vmul.f32 %v842, 1.442695
        %v849 = vpow.pop %v848
        %v850 = vmul.f32 %v843, 1.442695
        %v851 = vpow.pop %v850
        %v852 = vmul.f32 %v833, 0.0
        %v853 = vmul.f32 %v835, 0.0
        %v854 = vmul.f32 %v837, 0.0
        %v855 = vmul.f32 %v839, 0.0
        %v856 = vsel %vm607, %v845, 0.0
        %857 = vadd.xlane.f32.xlu0 %v856
        %v858 = vpop.xlane.xlu0 %857
        %v859 = vsel %vm607, %v847, 0.0
        %860 = vadd.xlane.f32.xlu0 %v859
        %v861 = vpop.xlane.xlu0 %860
        %v862 = vsel %vm607, %v849, 0.0
        %863 = vadd.xlane.f32.xlu0 %v862
        %v864 = vpop.xlane.xlu0 %863
        %v865 = vsel %vm607, %v851, 0.0
        %866 = vadd.xlane.f32.xlu0 %v865
        %v867 = vpop.xlane.xlu0 %866
        %v868 = vadd.f32 %v852, %v858
        %v869 = vadd.f32 %v853, %v861
        %v870 = vadd.f32 %v854, %v864
        %v871 = vadd.f32 %v855, %v867
        %v872 = vpack.c.bf16 %v845, %v845
        %v873 = vpack.c.bf16 %v847, %v847
        %v874 = vpack.c.bf16 %v849, %v849
        %v875 = vpack.c.bf16 %v851, %v851
        %876 = vrot.lane.b32.xlu0 %v600, 64
        %v877 = vpop.permute.xlu0 %876
        %v879 = vsel %vm607, %v872, 0
        %vm881 = vcmask 1043456
        %v883 = vsel %vm881, %v877, 0
        %885 = vmatprep.subr.bf16.mxu0 0
        %886 = vmatpush1.bf16.msra.mxu0 0
        %887 = vmatprep.subr.bf16.mxu0 0
        %888 = vmatpush1.bf16.msra.mxu0 0
        %889 = vmatprep.subr.bf16.mxu0 0
        %890 = vmatpush1.bf16.msra.mxu0 0
        %891 = vmatprep.subr.bf16.mxu0 0
        %892 = vmatpush1.bf16.msra.mxu0 0
        %893 = vmatprep.subr.bf16.mxu0 0
        %894 = vmatpush1.bf16.msra.mxu0 0
        %895 = vmatprep.subr.bf16.mxu0 0
        %896 = vmatpush1.bf16.msra.mxu0 0
        %897 = vmatprep.subr.bf16.mxu0 0
        %898 = vmatpush1.bf16.msra.mxu0 0
        %899 = vmatprep.subr.bf16.mxu0 0
        %900 = vmatpush1.bf16.msra.mxu0 %v883
        %901 = vmatprep.subr.bf16.mxu0 0
        %902 = vmatpush2.bf16.msra.mxu0 0
        %903 = vmatprep.subr.bf16.mxu0 0
        %904 = vmatpush2.bf16.msra.mxu0 0
        %905 = vmatprep.subr.bf16.mxu0 0
        %906 = vmatpush2.bf16.msra.mxu0 0
        %907 = vmatprep.subr.bf16.mxu0 0
        %908 = vmatpush2.bf16.msra.mxu0 0
        %909 = vmatprep.subr.bf16.mxu0 0
        %910 = vmatpush2.bf16.msra.mxu0 0
        %911 = vmatprep.subr.bf16.mxu0 0
        %912 = vmatpush2.bf16.msra.mxu0 0
        %913 = vmatprep.subr.bf16.mxu0 0
        %914 = vmatpush2.bf16.msra.mxu0 0
        %915 = vmatprep.subr.bf16.mxu0 0
        %916 = vmatpush2.bf16.msra.mxu0 0
        %917 = vmatprep.mubr.bf16.mxu0 0
        %918 = vmatmul.mubr.bf16.gmra.mxu0 %v879
        %v919 = vpop.f32.mrf.mxu0
        %v920 = vadd.f32 0.0, %v919
        %v921 = vpop.f32.mrf.mxu0
        %v922 = vpop.f32.mrf.mxu0
        %v923 = vpop.f32.mrf.mxu0
        %924 = vdwg.mxu0
        %925 = vrot.lane.b32.xlu0 %v601, 64
        %v926 = vpop.permute.xlu0 %925
        %v928 = vsel %vm607, %v873, 0
        %v931 = vsel %vm881, %v926, 0
        %933 = vmatprep.subr.bf16.mxu0 0
        %934 = vmatpush1.bf16.msra.mxu0 0
        %935 = vmatprep.subr.bf16.mxu0 0
        %936 = vmatpush1.bf16.msra.mxu0 0
        %937 = vmatprep.subr.bf16.mxu0 0
        %938 = vmatpush1.bf16.msra.mxu0 0
        %939 = vmatprep.subr.bf16.mxu0 0
        %940 = vmatpush1.bf16.msra.mxu0 0
        %941 = vmatprep.subr.bf16.mxu0 0
        %942 = vmatpush1.bf16.msra.mxu0 0
        %943 = vmatprep.subr.bf16.mxu0 0
        %944 = vmatpush1.bf16.msra.mxu0 0
        %945 = vmatprep.subr.bf16.mxu0 0
        %946 = vmatpush1.bf16.msra.mxu0 0
        %947 = vmatprep.subr.bf16.mxu0 0
        %948 = vmatpush1.bf16.msra.mxu0 %v931
        %949 = vmatprep.subr.bf16.mxu0 0
        %950 = vmatpush2.bf16.msra.mxu0 0
        %951 = vmatprep.subr.bf16.mxu0 0
        %952 = vmatpush2.bf16.msra.mxu0 0
        %953 = vmatprep.subr.bf16.mxu0 0
        %954 = vmatpush2.bf16.msra.mxu0 0
        %955 = vmatprep.subr.bf16.mxu0 0
        %956 = vmatpush2.bf16.msra.mxu0 0
        %957 = vmatprep.subr.bf16.mxu0 0
        %958 = vmatpush2.bf16.msra.mxu0 0
        %959 = vmatprep.subr.bf16.mxu0 0
        %960 = vmatpush2.bf16.msra.mxu0 0
        %961 = vmatprep.subr.bf16.mxu0 0
        %962 = vmatpush2.bf16.msra.mxu0 0
        %963 = vmatprep.subr.bf16.mxu0 0
        %964 = vmatpush2.bf16.msra.mxu0 0
        %965 = vmatprep.mubr.bf16.mxu0 0
        %966 = vmatmul.mubr.bf16.gmra.mxu0 %v928
        %v967 = vpop.f32.mrf.mxu0
        %v968 = vadd.f32 0.0, %v967
        %v969 = vpop.f32.mrf.mxu0
        %v970 = vpop.f32.mrf.mxu0
        %v971 = vpop.f32.mrf.mxu0
        %972 = vdwg.mxu0
        %973 = vrot.lane.b32.xlu0 %v602, 64
        %v974 = vpop.permute.xlu0 %973
        %v976 = vsel %vm607, %v874, 0
        %v979 = vsel %vm881, %v974, 0
        %981 = vmatprep.subr.bf16.mxu0 0
        %982 = vmatpush1.bf16.msra.mxu0 0
        %983 = vmatprep.subr.bf16.mxu0 0
        %984 = vmatpush1.bf16.msra.mxu0 0
        %985 = vmatprep.subr.bf16.mxu0 0
        %986 = vmatpush1.bf16.msra.mxu0 0
        %987 = vmatprep.subr.bf16.mxu0 0
        %988 = vmatpush1.bf16.msra.mxu0 0
        %989 = vmatprep.subr.bf16.mxu0 0
        %990 = vmatpush1.bf16.msra.mxu0 0
        %991 = vmatprep.subr.bf16.mxu0 0
        %992 = vmatpush1.bf16.msra.mxu0 0
        %993 = vmatprep.subr.bf16.mxu0 0
        %994 = vmatpush1.bf16.msra.mxu0 0
        %995 = vmatprep.subr.bf16.mxu0 0
        %996 = vmatpush1.bf16.msra.mxu0 %v979
        %997 = vmatprep.subr.bf16.mxu0 0
        %998 = vmatpush2.bf16.msra.mxu0 0
        %999 = vmatprep.subr.bf16.mxu0 0
        %1000 = vmatpush2.bf16.msra.mxu0 0
        %1001 = vmatprep.subr.bf16.mxu0 0
        %1002 = vmatpush2.bf16.msra.mxu0 0
        %1003 = vmatprep.subr.bf16.mxu0 0
        %1004 = vmatpush2.bf16.msra.mxu0 0
        %1005 = vmatprep.subr.bf16.mxu0 0
        %1006 = vmatpush2.bf16.msra.mxu0 0
        %1007 = vmatprep.subr.bf16.mxu0 0
        %1008 = vmatpush2.bf16.msra.mxu0 0
        %1009 = vmatprep.subr.bf16.mxu0 0
        %1010 = vmatpush2.bf16.msra.mxu0 0
        %1011 = vmatprep.subr.bf16.mxu0 0
        %1012 = vmatpush2.bf16.msra.mxu0 0
        %1013 = vmatprep.mubr.bf16.mxu0 0
        %1014 = vmatmul.mubr.bf16.gmra.mxu0 %v976
        %v1015 = vpop.f32.mrf.mxu0
        %v1016 = vadd.f32 0.0, %v1015
        %v1017 = vpop.f32.mrf.mxu0
        %v1018 = vpop.f32.mrf.mxu0
        %v1019 = vpop.f32.mrf.mxu0
        %1020 = vdwg.mxu0
        %1021 = vrot.lane.b32.xlu0 %v603, 64
        %v1022 = vpop.permute.xlu0 %1021
        %v1024 = vsel %vm607, %v875, 0
        %v1027 = vsel %vm881, %v1022, 0
        %1029 = vmatprep.subr.bf16.mxu0 0
        %1030 = vmatpush1.bf16.msra.mxu0 0
        %1031 = vmatprep.subr.bf16.mxu0 0
        %1032 = vmatpush1.bf16.msra.mxu0 0
        %1033 = vmatprep.subr.bf16.mxu0 0
        %1034 = vmatpush1.bf16.msra.mxu0 0
        %1035 = vmatprep.subr.bf16.mxu0 0
        %1036 = vmatpush1.bf16.msra.mxu0 0
        %1037 = vmatprep.subr.bf16.mxu0 0
        %1038 = vmatpush1.bf16.msra.mxu0 0
        %1039 = vmatprep.subr.bf16.mxu0 0
        %1040 = vmatpush1.bf16.msra.mxu0 0
        %1041 = vmatprep.subr.bf16.mxu0 0
        %1042 = vmatpush1.bf16.msra.mxu0 0
        %1043 = vmatprep.subr.bf16.mxu0 0
        %1044 = vmatpush1.bf16.msra.mxu0 %v1027
        %1045 = vmatprep.subr.bf16.mxu0 0
        %1046 = vmatpush2.bf16.msra.mxu0 0
        %1047 = vmatprep.subr.bf16.mxu0 0
        %1048 = vmatpush2.bf16.msra.mxu0 0
        %1049 = vmatprep.subr.bf16.mxu0 0
        %1050 = vmatpush2.bf16.msra.mxu0 0
        %1051 = vmatprep.subr.bf16.mxu0 0
        %1052 = vmatpush2.bf16.msra.mxu0 0
        %1053 = vmatprep.subr.bf16.mxu0 0
        %1054 = vmatpush2.bf16.msra.mxu0 0
        %1055 = vmatprep.subr.bf16.mxu0 0
        %1056 = vmatpush2.bf16.msra.mxu0 0
        %1057 = vmatprep.subr.bf16.mxu0 0
        %1058 = vmatpush2.bf16.msra.mxu0 0
        %1059 = vmatprep.subr.bf16.mxu0 0
        %1060 = vmatpush2.bf16.msra.mxu0 0
        %1061 = vmatprep.mubr.bf16.mxu0 0
        %1062 = vmatmul.mubr.bf16.gmra.mxu0 %v1024
        %v1063 = vpop.f32.mrf.mxu0
        %v1064 = vadd.f32 0.0, %v1063
        %v1065 = vpop.f32.mrf.mxu0
        %v1066 = vpop.f32.mrf.mxu0
        %v1067 = vpop.f32.mrf.mxu0
        %1068 = vdwg.mxu0
        %v1069 = vadd.f32 %v852, %v920
        %v1070 = vadd.f32 %v853, %v968
        %v1071 = vadd.f32 %v854, %v1016
        %v1072 = vadd.f32 %v855, %v1064
        %v1073 = vrcp.pop %v868
        %v1074 = vrcp.pop %v869
        %v1075 = vrcp.pop %v870
        %v1076 = vrcp.pop %v871
        %v1077 = vmul.f32 %v1069, %v1073
        %v1078 = vmul.f32 %v1070, %v1074
        %v1079 = vmul.f32 %v1071, %v1075
        %v1080 = vmul.f32 %v1072, %v1076
        %1082 = vrot.lane.b32.xlu0 %v1078, 8
        %v1083 = vpop.permute.xlu0 %1082
        %1086 = vrot.lane.b32.xlu0 %v1079, 16
        %v1087 = vpop.permute.xlu0 %1086
        %1090 = vrot.lane.b32.xlu0 %v1080, 24
        %v1091 = vpop.permute.xlu0 %1090
        %v1093 = vsel %vm607, %v1077, %v1083
        %vm1094 = vcmask 130048
        %v1095 = vsel %vm1094, %v1093, %v1087
        %vm1096 = vcmask 195584
        %v1097 = vsel %vm1096, %v1095, %v1091
        %v1098 = vpack.c.bf16 %v1097, %v1097
        %v1099 = vld [vmem:[%s5] sm:$0xf]
        %v1100 = vld [vmem:[%s5 + $0x4] sm:$0xf]
        %v1101 = vld [vmem:[%s5 + $0x8] sm:$0xf]
        %v1102 = vld [vmem:[%s5 + $0xc] sm:$0xf]
        %v1103 = vld [vmem:[%s6] sm:$0x1]
        %v1105 = vlaneseq
        %v1106 = vshrl.u32 %v1105, 7
        %v1107 = vsub.s32 0, %v1106
        %v1108 = vrot.slane %v1103, %v1107
        %v1114 = vunpack.c.l.b16 %v1099
        %v1115 = vunpack.c.l.b16 %v1100
        %v1116 = vunpack.c.l.b16 %v1101
        %v1117 = vunpack.c.l.b16 %v1102
        %v1118 = vpack.c.b16 %v1115, %v1114
        %v1119 = vpack.c.b16 %v1117, %v1116
        %v1123 = vsel %vm494, %v1098, 0
        %1125 = vmatprep.subr.bf16.mxu0 0
        %1126 = vmatpush1.bf16.msra.mxu0 0
        %1127 = vmatprep.subr.bf16.mxu0 0
        %1128 = vmatpush1.bf16.msra.mxu0 0
        %1129 = vmatprep.subr.bf16.mxu0 0
        %1130 = vmatpush1.bf16.msra.mxu0 0
        %1131 = vmatprep.subr.bf16.mxu0 0
        %1132 = vmatpush1.bf16.msra.mxu0 0
        %1133 = vmatprep.subr.bf16.mxu0 0
        %1134 = vmatpush1.bf16.msra.mxu0 0
        %1135 = vmatprep.subr.bf16.mxu0 0
        %1136 = vmatpush1.bf16.msra.mxu0 0
        %1137 = vmatprep.subr.bf16.mxu0 0
        %1138 = vmatpush1.bf16.msra.mxu0 %v1119
        %1139 = vmatprep.subr.bf16.mxu0 0
        %1140 = vmatpush1.bf16.msra.mxu0 %v1118
        %1141 = vmatprep.subr.bf16.mxu0 0
        %1142 = vmatpush2.bf16.msra.mxu0 0
        %1143 = vmatprep.subr.bf16.mxu0 0
        %1144 = vmatpush2.bf16.msra.mxu0 0
        %1145 = vmatprep.subr.bf16.mxu0 0
        %1146 = vmatpush2.bf16.msra.mxu0 0
        %1147 = vmatprep.subr.bf16.mxu0 0
        %1148 = vmatpush2.bf16.msra.mxu0 0
        %1149 = vmatprep.subr.bf16.mxu0 0
        %1150 = vmatpush2.bf16.msra.mxu0 0
        %1151 = vmatprep.subr.bf16.mxu0 0
        %1152 = vmatpush2.bf16.msra.mxu0 0
        %1153 = vmatprep.subr.bf16.mxu0 0
        %1154 = vmatpush2.bf16.msra.mxu0 0
        %1155 = vmatprep.subr.bf16.mxu0 0
        %1156 = vmatpush2.bf16.msra.mxu0 0
        %1157 = vmatprep.mubr.bf16.mxu0 0
        %1158 = vmatmul.mubr.bf16.gmra.mxu0 %v1123
        %v1159 = vpop.f32.mrf.mxu0
        %v1160 = vadd.f32 %v1108, %v1159
        %v1161 = vpop.f32.mrf.mxu0
        %v1162 = vpop.f32.mrf.mxu0
        %v1163 = vpop.f32.mrf.mxu0
        %1164 = vdwg.mxu0
        %v1165 = vadd.f32 %v491, %v1160
        %v1166 = vld [vmem:[%s7] sm:$0x1]
        %v1167 = vld [vmem:[%s8] sm:$0x1]
        %v1168 = vsel %vm494, %v1165, 0.0
        %1169 = vadd.xlane.f32.xlu0 %v1168
        %v1170 = vpop.xlane.xlu0 %1169
        %v1171 = vmul.f32 %v1170, %v498
        %v1172 = vsub.f32 %v1165, %v1171
        %v1173 = vmul.f32 %v1172, %v1172
        %v1174 = vsel %vm494, %v1173, 0.0
        %1175 = vadd.xlane.f32.xlu0 %v1174
        %v1176 = vpop.xlane.xlu0 %1175
        %v1177 = vmul.f32 %v1176, %v498
        %v1178 = vadd.f32 %v1177, 1e-05
        %v1179 = vrsqrt.pop %v1178
        %v1180 = vmul.f32 %v1172, %v1179
        %v1182 = vlaneseq
        %v1183 = vshrl.u32 %v1182, 7
        %v1184 = vsub.s32 0, %v1183
        %v1185 = vrot.slane %v1166, %v1184
        %v1187 = vmul.f32 %v1180, %v1185
        %v1189 = vlaneseq
        %v1190 = vshrl.u32 %v1189, 7
        %v1191 = vsub.s32 0, %v1190
        %v1192 = vrot.slane %v1167, %v1191
        %v1194 = vadd.f32 %v1187, %v1192
        %v1195 = vpack.c.bf16 %v1194, %v1194
        %v1196 = vld [vmem:[%s9] sm:$0xf]
        %v1197 = vld [vmem:[%s9 + $0x4] sm:$0xf]
        %v1198 = vld [vmem:[%s9 + $0x8] sm:$0xf]
        %v1199 = vld [vmem:[%s9 + $0xc] sm:$0xf]
        %v1200 = vld [vmem:[%s10] sm:$0x1]
        %v1202 = vlaneseq
        %v1203 = vshrl.u32 %v1202, 7
        %v1204 = vsub.s32 0, %v1203
        %v1205 = vrot.slane %v1200, %v1204
        %v1211 = vunpack.c.l.b16 %v1196
        %v1212 = vunpack.c.l.b16 %v1197
        %v1213 = vunpack.c.l.b16 %v1198
        %v1214 = vunpack.c.l.b16 %v1199
        %v1215 = vpack.c.b16 %v1212, %v1211
        %v1216 = vpack.c.b16 %v1214, %v1213
        %v1220 = vsel %vm494, %v1195, 0
        %1222 = vmatprep.subr.bf16.mxu0 0
        %1223 = vmatpush1.bf16.msra.mxu0 0
        %1224 = vmatprep.subr.bf16.mxu0 0
        %1225 = vmatpush1.bf16.msra.mxu0 0
        %1226 = vmatprep.subr.bf16.mxu0 0
        %1227 = vmatpush1.bf16.msra.mxu0 0
        %1228 = vmatprep.subr.bf16.mxu0 0
        %1229 = vmatpush1.bf16.msra.mxu0 0
        %1230 = vmatprep.subr.bf16.mxu0 0
        %1231 = vmatpush1.bf16.msra.mxu0 0
        %1232 = vmatprep.subr.bf16.mxu0 0
        %1233 = vmatpush1.bf16.msra.mxu0 0
        %1234 = vmatprep.subr.bf16.mxu0 0
        %1235 = vmatpush1.bf16.msra.mxu0 %v1216
        %1236 = vmatprep.subr.bf16.mxu0 0
        %1237 = vmatpush1.bf16.msra.mxu0 %v1215
        %1238 = vmatprep.subr.bf16.mxu0 0
        %1239 = vmatpush2.bf16.msra.mxu0 0
        %1240 = vmatprep.subr.bf16.mxu0 0
        %1241 = vmatpush2.bf16.msra.mxu0 0
        %1242 = vmatprep.subr.bf16.mxu0 0
        %1243 = vmatpush2.bf16.msra.mxu0 0
        %1244 = vmatprep.subr.bf16.mxu0 0
        %1245 = vmatpush2.bf16.msra.mxu0 0
        %1246 = vmatprep.subr.bf16.mxu0 0
        %1247 = vmatpush2.bf16.msra.mxu0 0
        %1248 = vmatprep.subr.bf16.mxu0 0
        %1249 = vmatpush2.bf16.msra.mxu0 0
        %1250 = vmatprep.subr.bf16.mxu0 0
        %1251 = vmatpush2.bf16.msra.mxu0 0
        %1252 = vmatprep.subr.bf16.mxu0 0
        %1253 = vmatpush2.bf16.msra.mxu0 0
        %1254 = vmatprep.mubr.bf16.mxu0 0
        %1255 = vmatmul.mubr.bf16.gmra.mxu0 %v1220
        %v1256 = vpop.f32.mrf.mxu0
        %v1257 = vadd.f32 %v1205, %v1256
        %v1258 = vpop.f32.mrf.mxu0
        %v1259 = vpop.f32.mrf.mxu0
        %v1260 = vpop.f32.mrf.mxu0
        %1261 = vdwg.mxu0
        %v1262 = vmul.f32 %v1257, %v1257
        %v1263 = vmul.f32 %v1257, %v1262
        %v1264 = vmul.f32 %v1263, 0.044715
        %v1265 = vadd.f32 %v1257, %v1264
        %v1266 = vmul.f32 %v1265, 0.7978846
        %v1267 = vtanh.pop %v1266
        %v1268 = vadd.f32 %v1267, 1.0
        %v1269 = vmul.f32 %v1268, 0.5
        %v1270 = vmul.f32 %v1257, %v1269
        %v1271 = vpack.c.bf16 %v1270, %v1270
        %v1272 = vld [vmem:[%s11] sm:$0xf]
        %v1273 = vld [vmem:[%s11 + $0x4] sm:$0xf]
        %v1274 = vld [vmem:[%s11 + $0x8] sm:$0xf]
        %v1275 = vld [vmem:[%s11 + $0xc] sm:$0xf]
        %v1276 = vld [vmem:[%s11 + $0x10] sm:$0xf]
        %v1277 = vld [vmem:[%s11 + $0x14] sm:$0xf]
        %v1278 = vld [vmem:[%s11 + $0x18] sm:$0xf]
        %v1279 = vld [vmem:[%s11 + $0x1c] sm:$0xf]
        %v1280 = vld [vmem:[%s11 + $0x20] sm:$0xf]
        %v1281 = vld [vmem:[%s11 + $0x24] sm:$0xf]
        %v1282 = vld [vmem:[%s11 + $0x28] sm:$0xf]
        %v1283 = vld [vmem:[%s11 + $0x2c] sm:$0xf]
        %v1284 = vld [vmem:[%s11 + $0x30] sm:$0xf]
        %v1285 = vld [vmem:[%s11 + $0x34] sm:$0xf]
        %v1286 = vld [vmem:[%s11 + $0x38] sm:$0xf]
        %v1287 = vld [vmem:[%s11 + $0x3c] sm:$0xf]
        %v1288 = vld [vmem:[%s12] sm:$0x1]
        %v1290 = vlaneseq
        %v1291 = vshrl.u32 %v1290, 7
        %v1292 = vsub.s32 0, %v1291
        %v1293 = vrot.slane %v1288, %v1292
        %v1311 = vunpack.c.l.b16 %v1272
        %v1312 = vunpack.c.l.b16 %v1273
        %v1313 = vunpack.c.l.b16 %v1274
        %v1314 = vunpack.c.l.b16 %v1275
        %v1315 = vunpack.c.l.b16 %v1276
        %v1316 = vunpack.c.l.b16 %v1277
        %v1317 = vunpack.c.l.b16 %v1278
        %v1318 = vunpack.c.l.b16 %v1279
        %v1319 = vunpack.c.l.b16 %v1280
        %v1320 = vunpack.c.l.b16 %v1281
        %v1321 = vunpack.c.l.b16 %v1282
        %v1322 = vunpack.c.l.b16 %v1283
        %v1323 = vunpack.c.l.b16 %v1284
        %v1324 = vunpack.c.l.b16 %v1285
        %v1325 = vunpack.c.l.b16 %v1286
        %v1326 = vunpack.c.l.b16 %v1287
        %v1327 = vpack.c.b16 %v1312, %v1311
        %v1328 = vpack.c.b16 %v1314, %v1313
        %v1329 = vpack.c.b16 %v1316, %v1315
        %v1330 = vpack.c.b16 %v1318, %v1317
        %v1331 = vpack.c.b16 %v1320, %v1319
        %v1332 = vpack.c.b16 %v1322, %v1321
        %v1333 = vpack.c.b16 %v1324, %v1323
        %v1334 = vpack.c.b16 %v1326, %v1325
        %1343 = vmatprep.subr.bf16.mxu0 0
        %1344 = vmatpush1.bf16.msra.mxu0 %v1334
        %1345 = vmatprep.subr.bf16.mxu0 0
        %1346 = vmatpush1.bf16.msra.mxu0 %v1333
        %1347 = vmatprep.subr.bf16.mxu0 0
        %1348 = vmatpush1.bf16.msra.mxu0 %v1332
        %1349 = vmatprep.subr.bf16.mxu0 0
        %1350 = vmatpush1.bf16.msra.mxu0 %v1331
        %1351 = vmatprep.subr.bf16.mxu0 0
        %1352 = vmatpush1.bf16.msra.mxu0 %v1330
        %1353 = vmatprep.subr.bf16.mxu0 0
        %1354 = vmatpush1.bf16.msra.mxu0 %v1329
        %1355 = vmatprep.subr.bf16.mxu0 0
        %1356 = vmatpush1.bf16.msra.mxu0 %v1328
        %1357 = vmatprep.subr.bf16.mxu0 0
        %1358 = vmatpush1.bf16.msra.mxu0 %v1327
        %1359 = vmatprep.subr.bf16.mxu0 0
        %1360 = vmatpush2.bf16.msra.mxu0 0
        %1361 = vmatprep.subr.bf16.mxu0 0
        %1362 = vmatpush2.bf16.msra.mxu0 0
        %1363 = vmatprep.subr.bf16.mxu0 0
        %1364 = vmatpush2.bf16.msra.mxu0 0
        %1365 = vmatprep.subr.bf16.mxu0 0
        %1366 = vmatpush2.bf16.msra.mxu0 0
        %1367 = vmatprep.subr.bf16.mxu0 0
        %1368 = vmatpush2.bf16.msra.mxu0 0
        %1369 = vmatprep.subr.bf16.mxu0 0
        %1370 = vmatpush2.bf16.msra.mxu0 0
        %1371 = vmatprep.subr.bf16.mxu0 0
        %1372 = vmatpush2.bf16.msra.mxu0 0
        %1373 = vmatprep.subr.bf16.mxu0 0
        %1374 = vmatpush2.bf16.msra.mxu0 0
        %1375 = vmatprep.mubr.bf16.mxu0 0
        %1376 = vmatmul.mubr.bf16.gmra.mxu0 %v1271
        %v1377 = vpop.f32.mrf.mxu0
        %v1378 = vadd.f32 %v1293, %v1377
        %v1379 = vpop.f32.mrf.mxu0
        %v1380 = vpop.f32.mrf.mxu0
        %v1381 = vpop.f32.mrf.mxu0
        %1382 = vdwg.mxu0
        %v1383 = vadd.f32 %v1165, %v1378
        %1384 = vst.msk [vmem:[%s485] sm:$0xff] %vm494, %v1383
        %s1385 = sand.u32 %s357, 1
        %s1386 = scalar_lea.sflag [#allocation3], %s1385
        %s1387 = sand.u32 %s357, 1
        %s1388 = smul.addr %s1387, 8
        %s1389 = scalar_lea.vmem [#allocation2], %s1388
        // Predicated region
        $region81: #{tpu_custom_call.1} parent=79 // pred_check
          %p1390 = pneg %p367
        $region82: #{tpu_custom_call.1} parent=79 // pred_check_branch
          %1392 = sbr.rel (%p1390) target = $region84
        $region83: #{tpu_custom_call.1} parent=79 // pred_region
          %s1394 = ssub.s32 128, 128
          %1395 = vsyncadd %s1386, %s1394
          %s1396 = smul.addr %s29, 128
          %s1397 = scalar_lea.hbm %s15, %s1396
          %s1399 = sshll.u32 %s1389, 4
          %s1400 = int_to_ptr.vmem [resolvable:$true] %s1399
          %1402 = dma.vmem_to_hbm [thread:$0]  %s1400, 128, %s1397, %s1386
        $region84: #{tpu_custom_call.1} parent=79 // pred_fallthru
          _
      $region80: #{tpu_custom_call.1} parent=5 // pred_fallthru
        _
      %p1403 = scmp.le.s32.totalorder 2, %s24
      // Predicated region
      $region85: #{tpu_custom_call.1} parent=5 // pred_check
        %p1404 = pneg %p1403
      $region86: #{tpu_custom_call.1} parent=5 // pred_check_branch
        %1406 = sbr.rel (%p1404) target = $region88
      $region87: #{tpu_custom_call.1} parent=5 // pred_region
        %s1407 = ssub.s32 %s24, 2
        // Predicated region
        $region89: #{tpu_custom_call.1} parent=87 // pred_check
          %p1408 = pneg %p373
        $region90: #{tpu_custom_call.1} parent=87 // pred_check_branch
          %1410 = sbr.rel (%p1408) target = $region92
        $region91: #{tpu_custom_call.1} parent=87 // pred_region
          %s1411 = sand.u32 %s358, 1
          %s1412 = scalar_lea.sflag [#allocation3], %s1411
          %s1413 = sand.u32 %s358, 1
          %s1414 = smul.addr %s1413, 8
          %s1415 = scalar_lea.vmem [#allocation2], %s1414
          %1416 = dma.done %s1412, 128
        $region92: #{tpu_custom_call.1} parent=87 // pred_fallthru
          _
      $region88: #{tpu_custom_call.1} parent=5 // pred_fallthru
        _
    $region6: #{tpu_custom_call.1} parent=1 // loop_footer
      %s28 = sadd.s32 1, %s24
    $region7: #{tpu_custom_call.1} parent=1 // loop_footer_branch
      %23 = sbr.rel target = $region3
    $region8: #{tpu_custom_call.1} parent=1 // loop_exit
      _
    %1417 = vsyncpa [#allocation3], 1
    %s1418 = scalar_lea.sflag [#allocation3], 1
    %1419 = vsyncpa %s1418, 1

</llo_original>
